<compile_context>
chip_gen: v7x
topology: tpu7x:2x2x1
jax: 0.10.0
libtpu: 0.0.40
codegen_flags: <defaults>
</compile_context>

<pallas_src>
import jax
import jax.numpy as jnp
from jax.experimental import pallas as pl
from jax.experimental.pallas import tpu as pltpu

# ----------------------------------------------------------------------------
# Small synthetic dimensions (stand-ins for resnet18 / BERT / ConVIRT sizes)
# ----------------------------------------------------------------------------
B = 2            # batch
C_IN = 4         # image channels (stand-in for 3)
IMG_HW = 16      # spatial size
IMG_FEATS = 64   # stand-in for image_out_features = 512
TXT_DIM = 32     # stand-in for BERT hidden = 768
HIDDEN_DIM = 64  # stand-in for hidden_dim = 1024
OUT_DIM = 32     # stand-in for out_dim = 512
SEQ = 8          # token sequence length
VOCAB = 64       # tiny vocabulary

LANE = 128
SUBLANE = 8


def _rup(n, m=LANE):
    return ((n + m - 1) // m) * m


K_IM2COL = 9 * C_IN            # 36
K_PAD = _rup(K_IM2COL)         # 128
C_PAD = _rup(IMG_FEATS)        # 128
D_PAD = _rup(TXT_DIM)          # 128
H_PAD = _rup(HIDDEN_DIM)       # 128
O_PAD = _rup(OUT_DIM)          # 128


def _pad_to(x, shape):
    pads = [(0, t - s) for s, t in zip(x.shape, shape)]
    return jnp.pad(x, pads)


def _full_spec(arr):
    # whole array resident in VMEM; same block for every grid step (no re-DMA)
    zeros = (0,) * arr.ndim
    return pl.BlockSpec(arr.shape, lambda b: zeros)


_VMEM = pl.BlockSpec(memory_space=pltpu.MemorySpace.VMEM)


# ----------------------------------------------------------------------------
# Kernel A: fused image path
#   im2col-patches -> one MXU matmul (conv) -> ReLU -> global-avg-pool
#   -> Linear -> ReLU -> Linear   (image projector)
# grid = (B,), "parallel": v7x shards images across its 2 TensorCores.
# ----------------------------------------------------------------------------
def _image_path_kernel(patches_ref, cw_ref, cb_ref, w1_ref, b1_ref, w2_ref,
                       b2_ref, o_ref):
    # patches_ref: [1, H*W, K_PAD]   (one image's lane-dense im2col slab)
    patches = patches_ref[0]                                            # [HW, K_PAD]
    conv = jnp.dot(patches, cw_ref[...],
                   preferred_element_type=jnp.float32) + cb_ref[...]    # [HW, C_PAD]
    conv = jnp.maximum(conv, 0.0)                                       # ReLU
    feat = jnp.mean(conv, axis=0, keepdims=True)                        # GAP -> [1, C_PAD]
    h = jnp.dot(feat, w1_ref[...],
                preferred_element_type=jnp.float32) + b1_ref[...]
    h = jnp.maximum(h, 0.0)
    o_ref[0] = jnp.dot(h, w2_ref[...],
                       preferred_element_type=jnp.float32) + b2_ref[...]  # [1, O_PAD]


def _image_path_call(patches, pp):
    Bn, HW, Kp = patches.shape
    return pl.pallas_call(
        _image_path_kernel,
        out_shape=jax.ShapeDtypeStruct((Bn, 1, O_PAD), jnp.float32),
        grid=(Bn,),
        in_specs=[
            pl.BlockSpec((1, HW, Kp), lambda b: (b, 0, 0)),
            _full_spec(pp["conv_w"]), _full_spec(pp["conv_b"]),
            _full_spec(pp["img_p_w1"]), _full_spec(pp["img_p_b1"]),
            _full_spec(pp["img_p_w2"]), _full_spec(pp["img_p_b2"]),
        ],
        out_specs=pl.BlockSpec((1, 1, O_PAD), lambda b: (b, 0, 0)),
        compiler_params=pltpu.CompilerParams(
            dimension_semantics=("parallel",)),
    )(patches, pp["conv_w"], pp["conv_b"],
      pp["img_p_w1"], pp["img_p_b1"], pp["img_p_w2"], pp["img_p_b2"])


# ----------------------------------------------------------------------------
# Kernel B: fused text path
#   masked mean of token embeddings -> tanh(Linear) pooler
#   -> Linear -> ReLU -> Linear   (text projector)
# Batch rows are padded to 8 sublanes in the wrapper; padded rows are sliced
# off afterwards.
# ----------------------------------------------------------------------------
def _text_path_kernel(emb_ref, mask_ref, pw_ref, pb_ref, w1_ref, b1_ref,
                      w2_ref, b2_ref, o_ref):
    emb = emb_ref[...]                     # [B_PAD, S, D_PAD]
    mask = mask_ref[...]                   # [B_PAD, S]  (f32)
    # TODO(synk): at real sequence lengths express this masked sum as a
    #             mask-matmul on the MXU instead of elementwise mul + XLU reduce.
    summed = jnp.sum(emb * mask[:, :, None], axis=1)                    # [B_PAD, D_PAD]
    cnt = jnp.maximum(jnp.sum(mask, axis=1, keepdims=True), 1.0)
    pooled = summed / cnt
    pooled = jnp.tanh(jnp.dot(pooled, pw_ref[...],
                              preferred_element_type=jnp.float32) + pb_ref[...])
    h = jnp.dot(pooled, w1_ref[...],
                preferred_element_type=jnp.float32) + b1_ref[...]
    h = jnp.maximum(h, 0.0)
    o_ref[...] = jnp.dot(h, w2_ref[...],
                         preferred_element_type=jnp.float32) + b2_ref[...]  # [B_PAD, O_PAD]


def _text_path_call(emb_p, mask_p, pp):
    Bp = emb_p.shape[0]
    return pl.pallas_call(
        _text_path_kernel,
        out_shape=jax.ShapeDtypeStruct((Bp, O_PAD), jnp.float32),
        in_specs=[_VMEM] * 8,
        out_specs=_VMEM,
    )(emb_p, mask_p, pp["pool_w"], pp["pool_b"],
      pp["txt_p_w1"], pp["txt_p_b1"], pp["txt_p_w2"], pp["txt_p_b2"])


# ----------------------------------------------------------------------------
# Wrapper-side glue (fused by XLA under jit): transpose + pad + im2col, gather
# ----------------------------------------------------------------------------
def _im2col_3x3(x_nhwc):
    Bn, H, W, C = x_nhwc.shape
    xp = jnp.pad(x_nhwc, ((0, 0), (1, 1), (1, 1), (0, 0)))
    taps = [xp[:, kh:kh + H, kw:kw + W, :] for kh in range(3) for kw in range(3)]
    patches = jnp.concatenate(taps, axis=-1)          # [B, H, W, 9*C]
    return patches.reshape(Bn, H * W, 9 * C)


@jax.jit
def convirt_forward(padded_params, image_batch_nchw, text_batch):
    # ---------------- image path ----------------
    x_nhwc = jnp.transpose(image_batch_nchw, (0, 2, 3, 1))
    patches = _im2col_3x3(x_nhwc)                                       # [B, HW, 36]
    patches = _pad_to(patches, (patches.shape[0], patches.shape[1], K_PAD))
    out_img = _image_path_call(patches, padded_params)                  # [B, 1, O_PAD]
    repr_image = out_img[:, 0, :OUT_DIM]

    # ---------------- text path -----------------
    ids = jnp.squeeze(text_batch["input_ids"], axis=1)                  # [B, S]
    mask = jnp.squeeze(text_batch["attention_mask"], axis=1).astype(jnp.float32)
    Bn = ids.shape[0]
    Bp = max(_rup(Bn, SUBLANE), SUBLANE)
    # TODO(synk): at real vocab sizes replace this XLA gather with scalar-prefetch
    #             row indexing of the embedding table inside the kernel.
    emb = padded_params["tok_emb"][ids]                                 # [B, S, D_PAD]
    emb_p = jnp.pad(emb, ((0, Bp - Bn), (0, 0), (0, 0)))
    mask_p = jnp.pad(mask, ((0, Bp - Bn), (0, 0)))
    out_txt = _text_path_call(emb_p, mask_p, padded_params)             # [Bp, O_PAD]
    repr_text = out_txt[:Bn, :OUT_DIM]

    return repr_image, repr_text


# ----------------------------------------------------------------------------
# Parameter init (logical shapes) + one-time zero-padding to lane-dense shapes
# ----------------------------------------------------------------------------
def init_params(key):
    ks = jax.random.split(key, 8)
    f32 = jnp.float32

    def dense(k, shape, scale=0.05):
        return (scale * jax.random.normal(k, shape)).astype(f32)

    return {
        # image backbone stand-in: 3x3 conv (HWIO) + bias
        "conv_w": dense(ks[0], (3, 3, C_IN, IMG_FEATS)),
        "conv_b": jnp.zeros((1, IMG_FEATS), f32),
        # text encoder stand-in: token embedding + tanh(Linear) pooler
        "tok_emb": dense(ks[1], (VOCAB, TXT_DIM)),
        "pool_w": dense(ks[2], (TXT_DIM, TXT_DIM)),
        "pool_b": jnp.zeros((1, TXT_DIM), f32),
        # image projector: Linear -> ReLU -> Linear
        "img_p_w1": dense(ks[3], (IMG_FEATS, HIDDEN_DIM)),
        "img_p_b1": jnp.zeros((1, HIDDEN_DIM), f32),
        "img_p_w2": dense(ks[4], (HIDDEN_DIM, OUT_DIM)),
        "img_p_b2": jnp.zeros((1, OUT_DIM), f32),
        # text projector: Linear -> ReLU -> Linear
        "txt_p_w1": dense(ks[5], (TXT_DIM, HIDDEN_DIM)),
        "txt_p_b1": jnp.zeros((1, HIDDEN_DIM), f32),
        "txt_p_w2": dense(ks[6], (HIDDEN_DIM, OUT_DIM)),
        "txt_p_b2": jnp.zeros((1, OUT_DIM), f32),
    }


def pad_params(p):
    # zero padding keeps results exact: padded rows/cols contribute 0, biases in
    # padded columns are 0, ReLU(0)=0, tanh(0)=0, so padded lanes stay inert.
    return {
        "conv_w": _pad_to(p["conv_w"].reshape(K_IM2COL, IMG_FEATS), (K_PAD, C_PAD)),
        "conv_b": _pad_to(p["conv_b"], (1, C_PAD)),
        "tok_emb": _pad_to(p["tok_emb"], (VOCAB, D_PAD)),
        "pool_w": _pad_to(p["pool_w"], (D_PAD, D_PAD)),
        "pool_b": _pad_to(p["pool_b"], (1, D_PAD)),
        "img_p_w1": _pad_to(p["img_p_w1"], (C_PAD, H_PAD)),
        "img_p_b1": _pad_to(p["img_p_b1"], (1, H_PAD)),
        "img_p_w2": _pad_to(p["img_p_w2"], (H_PAD, O_PAD)),
        "img_p_b2": _pad_to(p["img_p_b2"], (1, O_PAD)),
        "txt_p_w1": _pad_to(p["txt_p_w1"], (D_PAD, H_PAD)),
        "txt_p_b1": _pad_to(p["txt_p_b1"], (1, H_PAD)),
        "txt_p_w2": _pad_to(p["txt_p_w2"], (H_PAD, O_PAD)),
        "txt_p_b2": _pad_to(p["txt_p_b2"], (1, O_PAD)),
    }


if __name__ == "__main__":
    key = jax.random.PRNGKey(0)
    k_img, k_txt, k_params = jax.random.split(key, 3)

    params = init_params(k_params)
    padded = pad_params(params)

    # inputs consistent with ConVIRT.forward(image_batch, text_batch)
    image_batch = jax.random.normal(k_img, (B, C_IN, IMG_HW, IMG_HW), jnp.float32)  # NCHW
    text_batch = {
        "input_ids": jax.random.randint(k_txt, (B, 1, SEQ), 0, VOCAB, dtype=jnp.int32),
        "attention_mask": jnp.ones((B, 1, SEQ), jnp.int32),
    }

    repr_image, repr_text = convirt_forward(padded, image_batch, text_batch)
    jax.block_until_ready((repr_image, repr_text))

    assert repr_image.shape == (B, OUT_DIM)
    assert repr_text.shape == (B, OUT_DIM)
    print("KERNEL_OK")
</pallas_src>

<mosaic_0001>
module attributes {stable_mosaic.version = 11 : i64} {
  func.func @_image_path_kernel(%arg0: i32, %arg1: memref<1x256x128xf32, #tpu.memory_space<vmem>>, %arg2: memref<128x128xf32, #tpu.memory_space<vmem>>, %arg3: memref<1x128xf32, #tpu.memory_space<vmem>>, %arg4: memref<128x128xf32, #tpu.memory_space<vmem>>, %arg5: memref<1x128xf32, #tpu.memory_space<vmem>>, %arg6: memref<128x128xf32, #tpu.memory_space<vmem>>, %arg7: memref<1x128xf32, #tpu.memory_space<vmem>>, %arg8: memref<1x1x128xf32, #tpu.memory_space<vmem>>) attributes {dimension_semantics = [#tpu.dimension_semantics<parallel>], iteration_bounds = array<i64: 2>, scalar_prefetch = 0 : i64, scratch_operands = 0 : i64, tpu.core_type = #tpu.core_type<tc>, window_params = [{transform_indices = @transform_0, window_bounds = array<i64: 1, 256, 128>}, {pipeline_mode = #tpu.pipeline_mode<synchronous>, transform_indices = @transform_1, window_bounds = array<i64: 128, 128>}, {pipeline_mode = #tpu.pipeline_mode<synchronous>, transform_indices = @transform_2, window_bounds = array<i64: 1, 128>}, {pipeline_mode = #tpu.pipeline_mode<synchronous>, transform_indices = @transform_3, window_bounds = array<i64: 128, 128>}, {pipeline_mode = #tpu.pipeline_mode<synchronous>, transform_indices = @transform_4, window_bounds = array<i64: 1, 128>}, {pipeline_mode = #tpu.pipeline_mode<synchronous>, transform_indices = @transform_5, window_bounds = array<i64: 128, 128>}, {pipeline_mode = #tpu.pipeline_mode<synchronous>, transform_indices = @transform_6, window_bounds = array<i64: 1, 128>}, {transform_indices = @transform_7, window_bounds = array<i64: 1, 1, 128>}]} {
    %c0 = arith.constant 0 : index
    %c0_0 = arith.constant 0 : index
    %c0_1 = arith.constant 0 : index
    %0 = vector.load %arg1[%c0, %c0_0, %c0_1] : memref<1x256x128xf32, #tpu.memory_space<vmem>>, vector<1x256x128xf32>
    %1 = vector.shape_cast %0 : vector<1x256x128xf32> to vector<256x128xf32>
    %c0_2 = arith.constant 0 : index
    %c0_3 = arith.constant 0 : index
    %2 = vector.load %arg2[%c0_2, %c0_3] : memref<128x128xf32, #tpu.memory_space<vmem>>, vector<128x128xf32>
    %cst = arith.constant dense<0.000000e+00> : vector<256x128xf32>
    %3 = tpu.matmul %1, %2, %cst {dimension_numbers = #tpu.dot_dimension_numbers<[1], [0], [0], [1], [0, 0, 1, 1], [], []>} : vector<256x128xf32>, vector<128x128xf32>, vector<256x128xf32> -> vector<256x128xf32>
    %c0_4 = arith.constant 0 : index
    %c0_5 = arith.constant 0 : index
    %4 = vector.load %arg3[%c0_4, %c0_5] : memref<1x128xf32, #tpu.memory_space<vmem>>, vector<1x128xf32>
    %5 = vector.broadcast %4 : vector<1x128xf32> to vector<256x128xf32>
    %6 = arith.addf %3, %5 : vector<256x128xf32>
    %cst_6 = arith.constant 0.000000e+00 : f32
    %7 = vector.broadcast %cst_6 : f32 to vector<256x128xf32>
    %8 = arith.maximumf %6, %7 : vector<256x128xf32>
    %cst_7 = arith.constant dense<0.000000e+00> : vector<128xf32>
    %9 = vector.multi_reduction <add>, %8, %cst_7 [0] : vector<256x128xf32> to vector<128xf32>
    %10 = vector.shape_cast %9 : vector<128xf32> to vector<1x128xf32>
    %cst_8 = arith.constant 2.560000e+02 : f32
    %11 = vector.broadcast %cst_8 : f32 to vector<1x128xf32>
    %12 = arith.divf %10, %11 : vector<1x128xf32>
    %c0_9 = arith.constant 0 : index
    %c0_10 = arith.constant 0 : index
    %13 = vector.load %arg4[%c0_9, %c0_10] : memref<128x128xf32, #tpu.memory_space<vmem>>, vector<128x128xf32>
    %cst_11 = arith.constant dense<0.000000e+00> : vector<1x128xf32>
    %14 = tpu.matmul %12, %13, %cst_11 {dimension_numbers = #tpu.dot_dimension_numbers<[1], [0], [0], [1], [0, 0, 1, 1], [], []>} : vector<1x128xf32>, vector<128x128xf32>, vector<1x128xf32> -> vector<1x128xf32>
    %c0_12 = arith.constant 0 : index
    %c0_13 = arith.constant 0 : index
    %15 = vector.load %arg5[%c0_12, %c0_13] : memref<1x128xf32, #tpu.memory_space<vmem>>, vector<1x128xf32>
    %16 = arith.addf %14, %15 : vector<1x128xf32>
    %cst_14 = arith.constant 0.000000e+00 : f32
    %17 = vector.broadcast %cst_14 : f32 to vector<1x128xf32>
    %18 = arith.maximumf %16, %17 : vector<1x128xf32>
    %c0_15 = arith.constant 0 : index
    %c0_16 = arith.constant 0 : index
    %19 = vector.load %arg6[%c0_15, %c0_16] : memref<128x128xf32, #tpu.memory_space<vmem>>, vector<128x128xf32>
    %cst_17 = arith.constant dense<0.000000e+00> : vector<1x128xf32>
    %20 = tpu.matmul %18, %19, %cst_17 {dimension_numbers = #tpu.dot_dimension_numbers<[1], [0], [0], [1], [0, 0, 1, 1], [], []>} : vector<1x128xf32>, vector<128x128xf32>, vector<1x128xf32> -> vector<1x128xf32>
    %c0_18 = arith.constant 0 : index
    %c0_19 = arith.constant 0 : index
    %21 = vector.load %arg7[%c0_18, %c0_19] : memref<1x128xf32, #tpu.memory_space<vmem>>, vector<1x128xf32>
    %22 = arith.addf %20, %21 : vector<1x128xf32>
    %c0_20 = arith.constant 0 : index
    %c0_21 = arith.constant 0 : index
    %c0_22 = arith.constant 0 : index
    %23 = vector.load %arg8[%c0_20, %c0_21, %c0_22] : memref<1x1x128xf32, #tpu.memory_space<vmem>>, vector<1x1x128xf32>
    %24 = vector.shape_cast %23 : vector<1x1x128xf32> to vector<1x128xf32>
    %25 = vector.shape_cast %22 : vector<1x128xf32> to vector<1x1x128xf32>
    tpu.vector_store %arg8[%c0_20, %c0_21, %c0_22], %25 {strides = array<i32>} : memref<1x1x128xf32, #tpu.memory_space<vmem>>, vector<1x1x128xf32>,
    return
  }
  func.func @transform_0(%arg0: i32) -> (i32, i32, i32) {
    %c0_i32 = arith.constant 0 : i32
    %c0_i32_0 = arith.constant 0 : i32
    %c0_i32_1 = arith.constant 0 : i32
    return %arg0, %c0_i32, %c0_i32_0 : i32, i32, i32
  }
  func.func @transform_1(%arg0: i32) -> (i32, i32) {
    %c0_i32 = arith.constant 0 : i32
    %c0_i32_0 = arith.constant 0 : i32
    %c0_i32_1 = arith.constant 0 : i32
    return %c0_i32, %c0_i32_0 : i32, i32
  }
  func.func @transform_2(%arg0: i32) -> (i32, i32) {
    %c0_i32 = arith.constant 0 : i32
    %c0_i32_0 = arith.constant 0 : i32
    %c0_i32_1 = arith.constant 0 : i32
    return %c0_i32, %c0_i32_0 : i32, i32
  }
  func.func @transform_3(%arg0: i32) -> (i32, i32) {
    %c0_i32 = arith.constant 0 : i32
    %c0_i32_0 = arith.constant 0 : i32
    %c0_i32_1 = arith.constant 0 : i32
    return %c0_i32, %c0_i32_0 : i32, i32
  }
  func.func @transform_4(%arg0: i32) -> (i32, i32) {
    %c0_i32 = arith.constant 0 : i32
    %c0_i32_0 = arith.constant 0 : i32
    %c0_i32_1 = arith.constant 0 : i32
    return %c0_i32, %c0_i32_0 : i32, i32
  }
  func.func @transform_5(%arg0: i32) -> (i32, i32) {
    %c0_i32 = arith.constant 0 : i32
    %c0_i32_0 = arith.constant 0 : i32
    %c0_i32_1 = arith.constant 0 : i32
    return %c0_i32, %c0_i32_0 : i32, i32
  }
  func.func @transform_6(%arg0: i32) -> (i32, i32) {
    %c0_i32 = arith.constant 0 : i32
    %c0_i32_0 = arith.constant 0 : i32
    %c0_i32_1 = arith.constant 0 : i32
    return %c0_i32, %c0_i32_0 : i32, i32
  }
  func.func @transform_7(%arg0: i32) -> (i32, i32, i32) {
    %c0_i32 = arith.constant 0 : i32
    %c0_i32_0 = arith.constant 0 : i32
    %c0_i32_1 = arith.constant 0 : i32
    return %arg0, %c0_i32, %c0_i32_0 : i32, i32, i32
  }
}

module attributes {stable_mosaic.version = 11 : i64} {
  func.func @_text_path_kernel(%arg0: memref<8x8x128xf32, #tpu.memory_space<vmem>>, %arg1: memref<8x8xf32, #tpu.memory_space<vmem>>, %arg2: memref<128x128xf32, #tpu.memory_space<vmem>>, %arg3: memref<1x128xf32, #tpu.memory_space<vmem>>, %arg4: memref<128x128xf32, #tpu.memory_space<vmem>>, %arg5: memref<1x128xf32, #tpu.memory_space<vmem>>, %arg6: memref<128x128xf32, #tpu.memory_space<vmem>>, %arg7: memref<1x128xf32, #tpu.memory_space<vmem>>, %arg8: memref<8x128xf32, #tpu.memory_space<vmem>>) attributes {dimension_semantics = [], scalar_prefetch = 0 : i64, scratch_operands = 0 : i64, tpu.core_type = #tpu.core_type<tc>} {
    %c0 = arith.constant 0 : index
    %c0_0 = arith.constant 0 : index
    %c0_1 = arith.constant 0 : index
    %0 = vector.load %arg0[%c0, %c0_0, %c0_1] : memref<8x8x128xf32, #tpu.memory_space<vmem>>, vector<8x8x128xf32>
    %c0_2 = arith.constant 0 : index
    %c0_3 = arith.constant 0 : index
    %1 = vector.load %arg1[%c0_2, %c0_3] : memref<8x8xf32, #tpu.memory_space<vmem>>, vector<8x8xf32>
    %2 = vector.shape_cast %1 : vector<8x8xf32> to vector<8x8x1xf32>
    %3 = vector.broadcast %2 : vector<8x8x1xf32> to vector<8x8x128xf32>
    %4 = arith.mulf %0, %3 : vector<8x8x128xf32>
    %cst = arith.constant dense<0.000000e+00> : vector<8x128xf32>
    %5 = vector.multi_reduction <add>, %4, %cst [1] : vector<8x8x128xf32> to vector<8x128xf32>
    %cst_4 = arith.constant dense<0.000000e+00> : vector<8xf32>
    %6 = vector.multi_reduction <add>, %1, %cst_4 [1] : vector<8x8xf32> to vector<8xf32>
    %7 = vector.shape_cast %6 : vector<8xf32> to vector<8x1xf32>
    %cst_5 = arith.constant 1.000000e+00 : f32
    %8 = vector.broadcast %cst_5 : f32 to vector<8x1xf32>
    %9 = arith.maximumf %7, %8 : vector<8x1xf32>
    %10 = vector.broadcast %9 : vector<8x1xf32> to vector<8x128xf32>
    %11 = arith.divf %5, %10 : vector<8x128xf32>
    %c0_6 = arith.constant 0 : index
    %c0_7 = arith.constant 0 : index
    %12 = vector.load %arg2[%c0_6, %c0_7] : memref<128x128xf32, #tpu.memory_space<vmem>>, vector<128x128xf32>
    %cst_8 = arith.constant dense<0.000000e+00> : vector<8x128xf32>
    %13 = tpu.matmul %11, %12, %cst_8 {dimension_numbers = #tpu.dot_dimension_numbers<[1], [0], [0], [1], [0, 0, 1, 1], [], []>} : vector<8x128xf32>, vector<128x128xf32>, vector<8x128xf32> -> vector<8x128xf32>
    %c0_9 = arith.constant 0 : index
    %c0_10 = arith.constant 0 : index
    %14 = vector.load %arg3[%c0_9, %c0_10] : memref<1x128xf32, #tpu.memory_space<vmem>>, vector<1x128xf32>
    %15 = vector.broadcast %14 : vector<1x128xf32> to vector<8x128xf32>
    %16 = arith.addf %13, %15 : vector<8x128xf32>
    %17 = math.tanh %16 : vector<8x128xf32>
    %c0_11 = arith.constant 0 : index
    %c0_12 = arith.constant 0 : index
    %18 = vector.load %arg4[%c0_11, %c0_12] : memref<128x128xf32, #tpu.memory_space<vmem>>, vector<128x128xf32>
    %cst_13 = arith.constant dense<0.000000e+00> : vector<8x128xf32>
    %19 = tpu.matmul %17, %18, %cst_13 {dimension_numbers = #tpu.dot_dimension_numbers<[1], [0], [0], [1], [0, 0, 1, 1], [], []>} : vector<8x128xf32>, vector<128x128xf32>, vector<8x128xf32> -> vector<8x128xf32>
    %c0_14 = arith.constant 0 : index
    %c0_15 = arith.constant 0 : index
    %20 = vector.load %arg5[%c0_14, %c0_15] : memref<1x128xf32, #tpu.memory_space<vmem>>, vector<1x128xf32>
    %21 = vector.broadcast %20 : vector<1x128xf32> to vector<8x128xf32>
    %22 = arith.addf %19, %21 : vector<8x128xf32>
    %cst_16 = arith.constant 0.000000e+00 : f32
    %23 = vector.broadcast %cst_16 : f32 to vector<8x128xf32>
    %24 = arith.maximumf %22, %23 : vector<8x128xf32>
    %c0_17 = arith.constant 0 : index
    %c0_18 = arith.constant 0 : index
    %25 = vector.load %arg6[%c0_17, %c0_18] : memref<128x128xf32, #tpu.memory_space<vmem>>, vector<128x128xf32>
    %cst_19 = arith.constant dense<0.000000e+00> : vector<8x128xf32>
    %26 = tpu.matmul %24, %25, %cst_19 {dimension_numbers = #tpu.dot_dimension_numbers<[1], [0], [0], [1], [0, 0, 1, 1], [], []>} : vector<8x128xf32>, vector<128x128xf32>, vector<8x128xf32> -> vector<8x128xf32>
    %c0_20 = arith.constant 0 : index
    %c0_21 = arith.constant 0 : index
    %27 = vector.load %arg7[%c0_20, %c0_21] : memref<1x128xf32, #tpu.memory_space<vmem>>, vector<1x128xf32>
    %28 = vector.broadcast %27 : vector<1x128xf32> to vector<8x128xf32>
    %29 = arith.addf %26, %28 : vector<8x128xf32>
    %c0_22 = arith.constant 0 : index
    %c0_23 = arith.constant 0 : index
    %30 = vector.load %arg8[%c0_22, %c0_23] : memref<8x128xf32, #tpu.memory_space<vmem>>, vector<8x128xf32>
    tpu.vector_store %arg8[%c0_22, %c0_23], %29 {strides = array<i32>} : memref<8x128xf32, #tpu.memory_space<vmem>>, vector<8x128xf32>,
    return
  }
}

</mosaic_0001>

<llo_original>
// kernel: convirt_forward.2
$region0: #{convirt_forward.2}
  #allocation0 [shape = 'u32[]', space=smem, size = 0x4, offset = 0x4, fixed_abs, tag = 'smem constant byte address 0x4 - core index']
  #allocation1 [shape = 'u32[144,128]{1,0:T(1,128)}', space=vmem, size = 0x12000, scoped, tag = 'internal scratch']
  %s0 = inlined_call_operand.vmem [shape: f32[2,256,128], index: 0, kind: input, shape index: {}]
  %s1 = inlined_call_operand.vmem [shape: f32[128,128], index: 1, kind: input, shape index: {}]
  %s2 = inlined_call_operand.vmem [shape: f32[1,128], index: 2, kind: input, shape index: {}]
  %s3 = inlined_call_operand.vmem [shape: f32[128,128], index: 3, kind: input, shape index: {}]
  %s4 = inlined_call_operand.vmem [shape: f32[1,128], index: 4, kind: input, shape index: {}]
  %s5 = inlined_call_operand.vmem [shape: f32[128,128], index: 5, kind: input, shape index: {}]
  %s6 = inlined_call_operand.vmem [shape: f32[1,128], index: 6, kind: input, shape index: {}]
  %s7 = inlined_call_operand.hbm [shape: f32[2,1,128], index: 7, kind: output, shape index: {}]
  %s8 = sld [smem:[#allocation0]]
  $region61: #{convirt_forward.2} parent=0
    _
  %s10 = ssub.s32 1, %s8
  %s11 = scalar_select 0, %s10, %s8
  $region1: #{convirt_forward.2} parent=0
    #allocation2 [shape = 'u8[1024]{0}', space=vmem, size = 0x400, scoped, tag = 'output window, operand 0']
    #allocation3 [shape = 's32[2]{0}', space=sflag, size = 0x8, scoped, tag = 'scoped memory for convirt_forward.2']
    %12 = vsyncpa [#allocation3], 0
    %s13 = scalar_lea.sflag [#allocation3], 1
    %14 = vsyncpa %s13, 0
    loop: start=0, step=1, limit=4
    $region2: #{convirt_forward.2} parent=1 // loop_pre_header
      _
    $region3: #{convirt_forward.2} parent=1 // loop_header
      %s16 = sphi 0, %s20
      %p17 = scmp.ge.s32.totalorder %s16, 4
      %s26 = sphi 0, %s28
      %s29 = sphi 0, %s26
      %s30 = sphi 0, %s29
      %s46 = sphi 0, %s30
      %s50 = sphi 0, %s50
      %s52 = sphi 0, %s50
      %s53 = sphi 0, %s52
      %s67 = sphi 0, %s53
      %s71 = sphi 0, %s71
      %s73 = sphi 0, %s71
      %s74 = sphi 0, %s73
      %s88 = sphi 0, %s74
      %s92 = sphi 0, %s92
      %s94 = sphi 0, %s92
      %s95 = sphi 0, %s94
      %s109 = sphi 0, %s95
      %s113 = sphi 0, %s113
      %s115 = sphi 0, %s113
      %s116 = sphi 0, %s115
      %s130 = sphi 0, %s116
      %s134 = sphi 0, %s134
      %s136 = sphi 0, %s134
      %s137 = sphi 0, %s136
      %s151 = sphi 0, %s137
      %s155 = sphi 0, %s155
      %s157 = sphi 0, %s155
      %s158 = sphi 0, %s157
      %s172 = sphi 0, %s158
      %s178 = sphi 0, %s180
      %s181 = sphi 0, %s178
      %s182 = sphi 0, %s181
      %s198 = sphi 0, %s182
    $region4: #{convirt_forward.2} parent=1 // loop_header_branch
      %19 = sbr.rel (%p17) target = $region8
    $region5: #{convirt_forward.2} parent=1 // loop_body
      %s21 = ssub.s32 %s16, 1
      %s22 = ssub.s32 %s16, 2
      %s23 = sadd.s32 %s16, 1
      %s24 = ssub.s32 %s16, %s23
      %p25 = scmp.eq.s32.totalorder %s24, 0
      %s27 = sadd.s32 %s26, 1
      %s28 = scalar_select %p25, %s26, %s27
      %p31 = pneg %p25
      %p32 = scmp.eq.s32.totalorder %s16, 1
      %p33 = por %p31, %p32
      %p34 = scmp.ne.s32.totalorder %s26, %s29
      %p35 = scmp.eq.s32.totalorder %s16, 0
      %p36 = por %p34, %p35
      %p37 = scmp.ne.s32.totalorder %s26, %s29
      %p38 = scmp.eq.s32.totalorder %s21, 1
      %p39 = por %p37, %p38
      %p40 = scmp.ne.s32.totalorder %s29, %s30
      %p41 = scmp.eq.s32.totalorder %s21, 0
      %p42 = por %p40, %p41
      %p43 = scmp.ne.s32.totalorder %s29, %s30
      %p44 = scmp.eq.s32.totalorder %s22, 1
      %p45 = por %p43, %p44
      %p47 = scmp.ne.s32.totalorder %s30, %s46
      %p48 = scmp.eq.s32.totalorder %s22, 0
      %p49 = por %p47, %p48
      %s51 = sadd.s32 %s50, 1
      %p54 = scmp.eq.s32.totalorder %s16, 1
      %p55 = scmp.ne.s32.totalorder %s50, %s52
      %p56 = scmp.eq.s32.totalorder %s16, 0
      %p57 = por %p55, %p56
      %p58 = scmp.ne.s32.totalorder %s50, %s52
      %p59 = scmp.eq.s32.totalorder %s21, 1
      %p60 = por %p58, %p59
      %p61 = scmp.ne.s32.totalorder %s52, %s53
      %p62 = scmp.eq.s32.totalorder %s21, 0
      %p63 = por %p61, %p62
      %p64 = scmp.ne.s32.totalorder %s52, %s53
      %p65 = scmp.eq.s32.totalorder %s22, 1
      %p66 = por %p64, %p65
      %p68 = scmp.ne.s32.totalorder %s53, %s67
      %p69 = scmp.eq.s32.totalorder %s22, 0
      %p70 = por %p68, %p69
      %s72 = sadd.s32 %s71, 1
      %p75 = scmp.eq.s32.totalorder %s16, 1
      %p76 = scmp.ne.s32.totalorder %s71, %s73
      %p77 = scmp.eq.s32.totalorder %s16, 0
      %p78 = por %p76, %p77
      %p79 = scmp.ne.s32.totalorder %s71, %s73
      %p80 = scmp.eq.s32.totalorder %s21, 1
      %p81 = por %p79, %p80
      %p82 = scmp.ne.s32.totalorder %s73, %s74
      %p83 = scmp.eq.s32.totalorder %s21, 0
      %p84 = por %p82, %p83
      %p85 = scmp.ne.s32.totalorder %s73, %s74
      %p86 = scmp.eq.s32.totalorder %s22, 1
      %p87 = por %p85, %p86
      %p89 = scmp.ne.s32.totalorder %s74, %s88
      %p90 = scmp.eq.s32.totalorder %s22, 0
      %p91 = por %p89, %p90
      %s93 = sadd.s32 %s92, 1
      %p96 = scmp.eq.s32.totalorder %s16, 1
      %p97 = scmp.ne.s32.totalorder %s92, %s94
      %p98 = scmp.eq.s32.totalorder %s16, 0
      %p99 = por %p97, %p98
      %p100 = scmp.ne.s32.totalorder %s92, %s94
      %p101 = scmp.eq.s32.totalorder %s21, 1
      %p102 = por %p100, %p101
      %p103 = scmp.ne.s32.totalorder %s94, %s95
      %p104 = scmp.eq.s32.totalorder %s21, 0
      %p105 = por %p103, %p104
      %p106 = scmp.ne.s32.totalorder %s94, %s95
      %p107 = scmp.eq.s32.totalorder %s22, 1
      %p108 = por %p106, %p107
      %p110 = scmp.ne.s32.totalorder %s95, %s109
      %p111 = scmp.eq.s32.totalorder %s22, 0
      %p112 = por %p110, %p111
      %s114 = sadd.s32 %s113, 1
      %p117 = scmp.eq.s32.totalorder %s16, 1
      %p118 = scmp.ne.s32.totalorder %s113, %s115
      %p119 = scmp.eq.s32.totalorder %s16, 0
      %p120 = por %p118, %p119
      %p121 = scmp.ne.s32.totalorder %s113, %s115
      %p122 = scmp.eq.s32.totalorder %s21, 1
      %p123 = por %p121, %p122
      %p124 = scmp.ne.s32.totalorder %s115, %s116
      %p125 = scmp.eq.s32.totalorder %s21, 0
      %p126 = por %p124, %p125
      %p127 = scmp.ne.s32.totalorder %s115, %s116
      %p128 = scmp.eq.s32.totalorder %s22, 1
      %p129 = por %p127, %p128
      %p131 = scmp.ne.s32.totalorder %s116, %s130
      %p132 = scmp.eq.s32.totalorder %s22, 0
      %p133 = por %p131, %p132
      %s135 = sadd.s32 %s134, 1
      %p138 = scmp.eq.s32.totalorder %s16, 1
      %p139 = scmp.ne.s32.totalorder %s134, %s136
      %p140 = scmp.eq.s32.totalorder %s16, 0
      %p141 = por %p139, %p140
      %p142 = scmp.ne.s32.totalorder %s134, %s136
      %p143 = scmp.eq.s32.totalorder %s21, 1
      %p144 = por %p142, %p143
      %p145 = scmp.ne.s32.totalorder %s136, %s137
      %p146 = scmp.eq.s32.totalorder %s21, 0
      %p147 = por %p145, %p146
      %p148 = scmp.ne.s32.totalorder %s136, %s137
      %p149 = scmp.eq.s32.totalorder %s22, 1
      %p150 = por %p148, %p149
      %p152 = scmp.ne.s32.totalorder %s137, %s151
      %p153 = scmp.eq.s32.totalorder %s22, 0
      %p154 = por %p152, %p153
      %s156 = sadd.s32 %s155, 1
      %p159 = scmp.eq.s32.totalorder %s16, 1
      %p160 = scmp.ne.s32.totalorder %s155, %s157
      %p161 = scmp.eq.s32.totalorder %s16, 0
      %p162 = por %p160, %p161
      %p163 = scmp.ne.s32.totalorder %s155, %s157
      %p164 = scmp.eq.s32.totalorder %s21, 1
      %p165 = por %p163, %p164
      %p166 = scmp.ne.s32.totalorder %s157, %s158
      %p167 = scmp.eq.s32.totalorder %s21, 0
      %p168 = por %p166, %p167
      %p169 = scmp.ne.s32.totalorder %s157, %s158
      %p170 = scmp.eq.s32.totalorder %s22, 1
      %p171 = por %p169, %p170
      %p173 = scmp.ne.s32.totalorder %s158, %s172
      %p174 = scmp.eq.s32.totalorder %s22, 0
      %p175 = por %p173, %p174
      %s176 = ssub.s32 %s16, %s23
      %p177 = scmp.eq.s32.totalorder %s176, 0
      %s179 = sadd.s32 %s178, 1
      %s180 = scalar_select %p177, %s178, %s179
      %p183 = pneg %p177
      %p184 = scmp.eq.s32.totalorder %s16, 1
      %p185 = por %p183, %p184
      %p186 = scmp.ne.s32.totalorder %s178, %s181
      %p187 = scmp.eq.s32.totalorder %s16, 0
      %p188 = por %p186, %p187
      %p189 = scmp.ne.s32.totalorder %s178, %s181
      %p190 = scmp.eq.s32.totalorder %s21, 1
      %p191 = por %p189, %p190
      %p192 = scmp.ne.s32.totalorder %s181, %s182
      %p193 = scmp.eq.s32.totalorder %s21, 0
      %p194 = por %p192, %p193
      %p195 = scmp.ne.s32.totalorder %s181, %s182
      %p196 = scmp.eq.s32.totalorder %s22, 1
      %p197 = por %p195, %p196
      %p199 = scmp.ne.s32.totalorder %s182, %s198
      %p200 = scmp.eq.s32.totalorder %s22, 0
      %p201 = por %p199, %p200
      %p202 = scmp.le.s32.totalorder 1, %s16
      %p203 = scmp.lt.s32.totalorder %s16, 3
      %p204 = pnand %p202, %p203
      %p205 = pneg %p204
      // Predicated region
      $region9: #{convirt_forward.2} parent=5 // pred_check
        _
      $region10: #{convirt_forward.2} parent=5 // pred_check_branch
        %207 = sbr.rel (%p204) target = $region12
      $region11: #{convirt_forward.2} parent=5 // pred_region
        %s208 = ssub.s32 %s16, 1
        // Predicated region
        $region13: #{convirt_forward.2} parent=11 // pred_check
          %p209 = pneg %p63
        $region14: #{convirt_forward.2} parent=11 // pred_check_branch
          %211 = sbr.rel (%p209) target = $region16
        $region15: #{convirt_forward.2} parent=11 // pred_region
          _
        $region16: #{convirt_forward.2} parent=11 // pred_fallthru
          _
        // Predicated region
        $region17: #{convirt_forward.2} parent=11 // pred_check
          %p212 = pneg %p84
        $region18: #{convirt_forward.2} parent=11 // pred_check_branch
          %214 = sbr.rel (%p212) target = $region20
        $region19: #{convirt_forward.2} parent=11 // pred_region
          _
        $region20: #{convirt_forward.2} parent=11 // pred_fallthru
          _
        // Predicated region
        $region21: #{convirt_forward.2} parent=11 // pred_check
          %p215 = pneg %p105
        $region22: #{convirt_forward.2} parent=11 // pred_check_branch
          %217 = sbr.rel (%p215) target = $region24
        $region23: #{convirt_forward.2} parent=11 // pred_region
          _
        $region24: #{convirt_forward.2} parent=11 // pred_fallthru
          _
        // Predicated region
        $region25: #{convirt_forward.2} parent=11 // pred_check
          %p218 = pneg %p126
        $region26: #{convirt_forward.2} parent=11 // pred_check_branch
          %220 = sbr.rel (%p218) target = $region28
        $region27: #{convirt_forward.2} parent=11 // pred_region
          _
        $region28: #{convirt_forward.2} parent=11 // pred_fallthru
          _
        // Predicated region
        $region29: #{convirt_forward.2} parent=11 // pred_check
          %p221 = pneg %p147
        $region30: #{convirt_forward.2} parent=11 // pred_check_branch
          %223 = sbr.rel (%p221) target = $region32
        $region31: #{convirt_forward.2} parent=11 // pred_region
          _
        $region32: #{convirt_forward.2} parent=11 // pred_fallthru
          _
        // Predicated region
        $region33: #{convirt_forward.2} parent=11 // pred_check
          %p224 = pneg %p168
        $region34: #{convirt_forward.2} parent=11 // pred_check_branch
          %226 = sbr.rel (%p224) target = $region36
        $region35: #{convirt_forward.2} parent=11 // pred_region
          _
        $region36: #{convirt_forward.2} parent=11 // pred_fallthru
          _
      $region12: #{convirt_forward.2} parent=5 // pred_fallthru
        _
      %p227 = scmp.lt.s32.totalorder %s16, 2
      // Predicated region
      $region37: #{convirt_forward.2} parent=5 // pred_check
        %p228 = pneg %p227
      $region38: #{convirt_forward.2} parent=5 // pred_check_branch
        %230 = sbr.rel (%p228) target = $region40
      $region39: #{convirt_forward.2} parent=5 // pred_region
        // Predicated region
        $region41: #{convirt_forward.2} parent=39 // pred_check
          %p231 = pneg %p36
        $region42: #{convirt_forward.2} parent=39 // pred_check_branch
          %233 = sbr.rel (%p231) target = $region44
        $region43: #{convirt_forward.2} parent=39 // pred_region
          %p234 = scmp.lt.s32.totalorder %s16, 1
          %s235 = scalar_select %p234, %s16, 1
          %s236 = smul.addr %s235, 32
          %s237 = smul.addr %s236, 8
          %s238 = scalar_lea.vmem %s0, %s237
        $region44: #{convirt_forward.2} parent=39 // pred_fallthru
          _
      $region40: #{convirt_forward.2} parent=5 // pred_fallthru
        _
      %p239 = scmp.le.s32.totalorder 1, %s16
      %p240 = scmp.lt.s32.totalorder %s16, 3
      %p241 = pnand %p239, %p240
      %p242 = pneg %p241
      // Predicated region
      $region45: #{convirt_forward.2} parent=5 // pred_check
        _
      $region46: #{convirt_forward.2} parent=5 // pred_check_branch
        %244 = sbr.rel (%p241) target = $region48
      $region47: #{convirt_forward.2} parent=5 // pred_region
        %s245 = ssub.s32 %s16, 1
        %p246 = scmp.lt.s32.totalorder %s21, 1
        %s247 = scalar_select %p246, %s21, 1
        %s248 = smul.addr %s247, 32
        %s249 = smul.addr %s248, 8
        %s250 = scalar_lea.vmem %s0, %s249
        %p251 = pneg %p42
        %p252 = pneg %p39
        %p253 = pneg %p63
        %p254 = pneg %p60
        %p255 = pneg %p84
        %p256 = pneg %p81
        %p257 = pneg %p105
        %p258 = pneg %p102
        %p259 = pneg %p126
        %p260 = pneg %p123
        %p261 = pneg %p147
        %p262 = pneg %p144
        %p263 = pneg %p168
        %p264 = pneg %p165
        %p265 = pneg %p194
        %p266 = pneg %p191
        %s267 = sand.u32 %s181, 1
        %s268 = scalar_lea.sflag [#allocation3], %s267
        %s269 = sand.u32 %s181, 1
        %s270 = scalar_lea.vmem [#allocation2], %s269
        %p271 = scmp.lt.s32.totalorder %s21, 1
        %s272 = scalar_select %p271, %s21, 1
        %s273 = smul.addr %s272, 32
        %s274 = smul.addr %s273, 8
        %s275 = scalar_lea.vmem %s0, %s274
        %v276 = vld [vmem:[%s275] sm:$0xff]
        %v277 = vld [vmem:[%s275 + $0x8] sm:$0xff]
        %v278 = vld [vmem:[%s275 + $0x10] sm:$0xff]
        %v279 = vld [vmem:[%s275 + $0x18] sm:$0xff]
        %v280 = vld [vmem:[%s275 + $0x20] sm:$0xff]
        %v281 = vld [vmem:[%s275 + $0x28] sm:$0xff]
        %v282 = vld [vmem:[%s275 + $0x30] sm:$0xff]
        %v283 = vld [vmem:[%s275 + $0x38] sm:$0xff]
        %v284 = vld [vmem:[%s275 + $0x40] sm:$0xff]
        %v285 = vld [vmem:[%s275 + $0x48] sm:$0xff]
        %v286 = vld [vmem:[%s275 + $0x50] sm:$0xff]
        %v287 = vld [vmem:[%s275 + $0x58] sm:$0xff]
        %v288 = vld [vmem:[%s275 + $0x60] sm:$0xff]
        %v289 = vld [vmem:[%s275 + $0x68] sm:$0xff]
        %v290 = vld [vmem:[%s275 + $0x70] sm:$0xff]
        %v291 = vld [vmem:[%s275 + $0x78] sm:$0xff]
        %v292 = vld [vmem:[%s275 + $0x80] sm:$0xff]
        %v293 = vld [vmem:[%s275 + $0x88] sm:$0xff]
        %v294 = vld [vmem:[%s275 + $0x90] sm:$0xff]
        %v295 = vld [vmem:[%s275 + $0x98] sm:$0xff]
        %v296 = vld [vmem:[%s275 + $0xa0] sm:$0xff]
        %v297 = vld [vmem:[%s275 + $0xa8] sm:$0xff]
        %v298 = vld [vmem:[%s275 + $0xb0] sm:$0xff]
        %v299 = vld [vmem:[%s275 + $0xb8] sm:$0xff]
        %v300 = vld [vmem:[%s275 + $0xc0] sm:$0xff]
        %v301 = vld [vmem:[%s275 + $0xc8] sm:$0xff]
        %v302 = vld [vmem:[%s275 + $0xd0] sm:$0xff]
        %v303 = vld [vmem:[%s275 + $0xd8] sm:$0xff]
        %v304 = vld [vmem:[%s275 + $0xe0] sm:$0xff]
        %v305 = vld [vmem:[%s275 + $0xe8] sm:$0xff]
        %v306 = vld [vmem:[%s275 + $0xf0] sm:$0xff]
        %v307 = vld [vmem:[%s275 + $0xf8] sm:$0xff]
        %v308 = vld [vmem:[%s1] sm:$0xff]
        %v309 = vld [vmem:[%s1 + $0x8] sm:$0xff]
        %v310 = vld [vmem:[%s1 + $0x10] sm:$0xff]
        %v311 = vld [vmem:[%s1 + $0x18] sm:$0xff]
        %v312 = vld [vmem:[%s1 + $0x20] sm:$0xff]
        %v313 = vld [vmem:[%s1 + $0x28] sm:$0xff]
        %v314 = vld [vmem:[%s1 + $0x30] sm:$0xff]
        %v315 = vld [vmem:[%s1 + $0x38] sm:$0xff]
        %v316 = vld [vmem:[%s1 + $0x40] sm:$0xff]
        %v317 = vld [vmem:[%s1 + $0x48] sm:$0xff]
        %v318 = vld [vmem:[%s1 + $0x50] sm:$0xff]
        %v319 = vld [vmem:[%s1 + $0x58] sm:$0xff]
        %v320 = vld [vmem:[%s1 + $0x60] sm:$0xff]
        %v321 = vld [vmem:[%s1 + $0x68] sm:$0xff]
        %v322 = vld [vmem:[%s1 + $0x70] sm:$0xff]
        %v323 = vld [vmem:[%s1 + $0x78] sm:$0xff]
        %v324 = vld [vmem:[%s2] sm:$0x1]
        %v326 = vlaneseq
        %v327 = vshrl.u32 %v326, 7
        %v328 = vsub.s32 0, %v327
        %v329 = vrot.slane %v324, %v328
        %331 = vmatprep.subr.mxu0 0.0
        %332 = vmatpush1.msra.mxu0 %v308
        %333 = vmatprep.subr.mxu0 0.0
        %334 = vmatpush1.msra.mxu0 %v309
        %335 = vmatprep.subr.mxu0 0.0
        %336 = vmatpush1.msra.mxu0 %v310
        %337 = vmatprep.subr.mxu0 0.0
        %338 = vmatpush1.msra.mxu0 %v311
        %339 = vmatprep.subr.mxu0 0.0
        %340 = vmatpush1.msra.mxu0 %v312
        %341 = vmatprep.subr.mxu0 0.0
        %342 = vmatpush1.msra.mxu0 %v313
        %343 = vmatprep.subr.mxu0 0.0
        %344 = vmatpush1.msra.mxu0 %v314
        %345 = vmatprep.subr.mxu0 0.0
        %346 = vmatpush1.msra.mxu0 %v315
        %347 = vmatprep.subr.mxu0 0.0
        %348 = vmatpush1.msra.mxu0 %v316
        %349 = vmatprep.subr.mxu0 0.0
        %350 = vmatpush1.msra.mxu0 %v317
        %351 = vmatprep.subr.mxu0 0.0
        %352 = vmatpush1.msra.mxu0 %v318
        %353 = vmatprep.subr.mxu0 0.0
        %354 = vmatpush1.msra.mxu0 %v319
        %355 = vmatprep.subr.mxu0 0.0
        %356 = vmatpush1.msra.mxu0 %v320
        %357 = vmatprep.subr.mxu0 0.0
        %358 = vmatpush1.msra.mxu0 %v321
        %359 = vmatprep.subr.mxu0 0.0
        %360 = vmatpush1.msra.mxu0 %v322
        %361 = vmatprep.subr.mxu0 0.0
        %362 = vmatpush1.msra.mxu0 %v323
        %363 = vmatprep.subr.mxu0 0.0
        %364 = vmatpush1.msra.mxu0 0.0
        %365 = vmatprep.subr.mxu0 0.0
        %366 = vmatpush1.msra.mxu0 0.0
        %367 = vmatprep.subr.mxu0 0.0
        %368 = vmatpush1.msra.mxu0 0.0
        %369 = vmatprep.subr.mxu0 0.0
        %370 = vmatpush1.msra.mxu0 0.0
        %371 = vmatprep.subr.mxu0 0.0
        %372 = vmatpush1.msra.mxu0 0.0
        %373 = vmatprep.subr.mxu0 0.0
        %374 = vmatpush1.msra.mxu0 0.0
        %375 = vmatprep.subr.mxu0 0.0
        %376 = vmatpush1.msra.mxu0 0.0
        %377 = vmatprep.subr.mxu0 0.0
        %378 = vmatpush1.msra.mxu0 0.0
        %379 = vmatprep.subr.mxu0 0.0
        %380 = vmatpush1.msra.mxu0 0.0
        %381 = vmatprep.subr.mxu0 0.0
        %382 = vmatpush1.msra.mxu0 0.0
        %383 = vmatprep.subr.mxu0 0.0
        %384 = vmatpush1.msra.mxu0 0.0
        %385 = vmatprep.subr.mxu0 0.0
        %386 = vmatpush1.msra.mxu0 0.0
        %387 = vmatprep.subr.mxu0 0.0
        %388 = vmatpush1.msra.mxu0 0.0
        %389 = vmatprep.subr.mxu0 0.0
        %390 = vmatpush1.msra.mxu0 0.0
        %391 = vmatprep.subr.mxu0 0.0
        %392 = vmatpush1.msra.mxu0 0.0
        %393 = vmatprep.subr.mxu0 0.0
        %394 = vmatpush1.msra.mxu0 0.0
        %395 = vmatprep.mubr.f32.mxu0 0.0
        %396 = vmatmul.mubr.f32.gmra.mrb[0].mxu0 %v276
        %v397 = vpop.f32.mrb[0].mxu0
        %v398 = vadd.f32 %v329, %v397
        %v399 = vpop.f32.mrb[0].mxu0
        %400 = vmatprep.mubr.f32.mxu0 0.0
        %401 = vmatmul.mubr.f32.gmra.mrb[0].mxu0 %v277
        %v402 = vpop.f32.mrb[0].mxu0
        %v403 = vadd.f32 %v329, %v402
        %v404 = vpop.f32.mrb[0].mxu0
        %405 = vmatprep.mubr.f32.mxu0 0.0
        %406 = vmatmul.mubr.f32.gmra.mrb[0].mxu0 %v278
        %v407 = vpop.f32.mrb[0].mxu0
        %v408 = vadd.f32 %v329, %v407
        %v409 = vpop.f32.mrb[0].mxu0
        %410 = vmatprep.mubr.f32.mxu0 0.0
        %411 = vmatmul.mubr.f32.gmra.mrb[0].mxu0 %v279
        %v412 = vpop.f32.mrb[0].mxu0
        %v413 = vadd.f32 %v329, %v412
        %v414 = vpop.f32.mrb[0].mxu0
        %415 = vmatprep.mubr.f32.mxu0 0.0
        %416 = vmatmul.mubr.f32.gmra.mrb[0].mxu0 %v280
        %v417 = vpop.f32.mrb[0].mxu0
        %v418 = vadd.f32 %v329, %v417
        %v419 = vpop.f32.mrb[0].mxu0
        %420 = vmatprep.mubr.f32.mxu0 0.0
        %421 = vmatmul.mubr.f32.gmra.mrb[0].mxu0 %v281
        %v422 = vpop.f32.mrb[0].mxu0
        %v423 = vadd.f32 %v329, %v422
        %v424 = vpop.f32.mrb[0].mxu0
        %425 = vmatprep.mubr.f32.mxu0 0.0
        %426 = vmatmul.mubr.f32.gmra.mrb[0].mxu0 %v282
        %v427 = vpop.f32.mrb[0].mxu0
        %v428 = vadd.f32 %v329, %v427
        %v429 = vpop.f32.mrb[0].mxu0
        %430 = vmatprep.mubr.f32.mxu0 0.0
        %431 = vmatmul.mubr.f32.gmra.mrb[0].mxu0 %v283
        %v432 = vpop.f32.mrb[0].mxu0
        %v433 = vadd.f32 %v329, %v432
        %v434 = vpop.f32.mrb[0].mxu0
        %435 = vmatprep.mubr.f32.mxu0 0.0
        %436 = vmatmul.mubr.f32.gmra.mrb[0].mxu0 %v284
        %v437 = vpop.f32.mrb[0].mxu0
        %v438 = vadd.f32 %v329, %v437
        %v439 = vpop.f32.mrb[0].mxu0
        %440 = vmatprep.mubr.f32.mxu0 0.0
        %441 = vmatmul.mubr.f32.gmra.mrb[0].mxu0 %v285
        %v442 = vpop.f32.mrb[0].mxu0
        %v443 = vadd.f32 %v329, %v442
        %v444 = vpop.f32.mrb[0].mxu0
        %445 = vmatprep.mubr.f32.mxu0 0.0
        %446 = vmatmul.mubr.f32.gmra.mrb[0].mxu0 %v286
        %v447 = vpop.f32.mrb[0].mxu0
        %v448 = vadd.f32 %v329, %v447
        %v449 = vpop.f32.mrb[0].mxu0
        %450 = vmatprep.mubr.f32.mxu0 0.0
        %451 = vmatmul.mubr.f32.gmra.mrb[0].mxu0 %v287
        %v452 = vpop.f32.mrb[0].mxu0
        %v453 = vadd.f32 %v329, %v452
        %v454 = vpop.f32.mrb[0].mxu0
        %455 = vmatprep.mubr.f32.mxu0 0.0
        %456 = vmatmul.mubr.f32.gmra.mrb[0].mxu0 %v288
        %v457 = vpop.f32.mrb[0].mxu0
        %v458 = vadd.f32 %v329, %v457
        %v459 = vpop.f32.mrb[0].mxu0
        %460 = vmatprep.mubr.f32.mxu0 0.0
        %461 = vmatmul.mubr.f32.gmra.mrb[0].mxu0 %v289
        %v462 = vpop.f32.mrb[0].mxu0
        %v463 = vadd.f32 %v329, %v462
        %v464 = vpop.f32.mrb[0].mxu0
        %465 = vmatprep.mubr.f32.mxu0 0.0
        %466 = vmatmul.mubr.f32.gmra.mrb[0].mxu0 %v290
        %v467 = vpop.f32.mrb[0].mxu0
        %v468 = vadd.f32 %v329, %v467
        %v469 = vpop.f32.mrb[0].mxu0
        %470 = vmatprep.mubr.f32.mxu0 0.0
        %471 = vmatmul.mubr.f32.gmra.mrb[0].mxu0 %v291
        %v472 = vpop.f32.mrb[0].mxu0
        %v473 = vadd.f32 %v329, %v472
        %v474 = vpop.f32.mrb[0].mxu0
        %475 = vmatprep.mubr.f32.mxu0 0.0
        %476 = vmatmul.mubr.f32.gmra.mrb[0].mxu0 %v292
        %v477 = vpop.f32.mrb[0].mxu0
        %v478 = vadd.f32 %v329, %v477
        %v479 = vpop.f32.mrb[0].mxu0
        %480 = vmatprep.mubr.f32.mxu0 0.0
        %481 = vmatmul.mubr.f32.gmra.mrb[0].mxu0 %v293
        %v482 = vpop.f32.mrb[0].mxu0
        %v483 = vadd.f32 %v329, %v482
        %v484 = vpop.f32.mrb[0].mxu0
        %485 = vmatprep.mubr.f32.mxu0 0.0
        %486 = vmatmul.mubr.f32.gmra.mrb[0].mxu0 %v294
        %v487 = vpop.f32.mrb[0].mxu0
        %v488 = vadd.f32 %v329, %v487
        %v489 = vpop.f32.mrb[0].mxu0
        %490 = vmatprep.mubr.f32.mxu0 0.0
        %491 = vmatmul.mubr.f32.gmra.mrb[0].mxu0 %v295
        %v492 = vpop.f32.mrb[0].mxu0
        %v493 = vadd.f32 %v329, %v492
        %v494 = vpop.f32.mrb[0].mxu0
        %495 = vmatprep.mubr.f32.mxu0 0.0
        %496 = vmatmul.mubr.f32.gmra.mrb[0].mxu0 %v296
        %v497 = vpop.f32.mrb[0].mxu0
        %v498 = vadd.f32 %v329, %v497
        %v499 = vpop.f32.mrb[0].mxu0
        %500 = vmatprep.mubr.f32.mxu0 0.0
        %501 = vmatmul.mubr.f32.gmra.mrb[0].mxu0 %v297
        %v502 = vpop.f32.mrb[0].mxu0
        %v503 = vadd.f32 %v329, %v502
        %v504 = vpop.f32.mrb[0].mxu0
        %505 = vmatprep.mubr.f32.mxu0 0.0
        %506 = vmatmul.mubr.f32.gmra.mrb[0].mxu0 %v298
        %v507 = vpop.f32.mrb[0].mxu0
        %v508 = vadd.f32 %v329, %v507
        %v509 = vpop.f32.mrb[0].mxu0
        %510 = vmatprep.mubr.f32.mxu0 0.0
        %511 = vmatmul.mubr.f32.gmra.mrb[0].mxu0 %v299
        %v512 = vpop.f32.mrb[0].mxu0
        %v513 = vadd.f32 %v329, %v512
        %v514 = vpop.f32.mrb[0].mxu0
        %515 = vmatprep.mubr.f32.mxu0 0.0
        %516 = vmatmul.mubr.f32.gmra.mrb[0].mxu0 %v300
        %v517 = vpop.f32.mrb[0].mxu0
        %v518 = vadd.f32 %v329, %v517
        %v519 = vpop.f32.mrb[0].mxu0
        %520 = vmatprep.mubr.f32.mxu0 0.0
        %521 = vmatmul.mubr.f32.gmra.mrb[0].mxu0 %v301
        %v522 = vpop.f32.mrb[0].mxu0
        %v523 = vadd.f32 %v329, %v522
        %v524 = vpop.f32.mrb[0].mxu0
        %525 = vmatprep.mubr.f32.mxu0 0.0
        %526 = vmatmul.mubr.f32.gmra.mrb[0].mxu0 %v302
        %v527 = vpop.f32.mrb[0].mxu0
        %v528 = vadd.f32 %v329, %v527
        %v529 = vpop.f32.mrb[0].mxu0
        %530 = vmatprep.mubr.f32.mxu0 0.0
        %531 = vmatmul.mubr.f32.gmra.mrb[0].mxu0 %v303
        %v532 = vpop.f32.mrb[0].mxu0
        %v533 = vadd.f32 %v329, %v532
        %v534 = vpop.f32.mrb[0].mxu0
        %535 = vmatprep.mubr.f32.mxu0 0.0
        %536 = vmatmul.mubr.f32.gmra.mrb[0].mxu0 %v304
        %v537 = vpop.f32.mrb[0].mxu0
        %v538 = vadd.f32 %v329, %v537
        %v539 = vpop.f32.mrb[0].mxu0
        %540 = vmatprep.mubr.f32.mxu0 0.0
        %541 = vmatmul.mubr.f32.gmra.mrb[0].mxu0 %v305
        %v542 = vpop.f32.mrb[0].mxu0
        %v543 = vadd.f32 %v329, %v542
        %v544 = vpop.f32.mrb[0].mxu0
        %545 = vmatprep.mubr.f32.mxu0 0.0
        %546 = vmatmul.mubr.f32.gmra.mrb[0].mxu0 %v306
        %v547 = vpop.f32.mrb[0].mxu0
        %v548 = vadd.f32 %v329, %v547
        %v549 = vpop.f32.mrb[0].mxu0
        %550 = vmatprep.mubr.f32.mxu0 0.0
        %551 = vmatmul.mubr.f32.gmra.mrb[0].mxu0 %v307
        %v552 = vpop.f32.mrb[0].mxu0
        %v553 = vadd.f32 %v329, %v552
        %v554 = vpop.f32.mrb[0].mxu0
        %555 = vdwg.mxu0
        %v556 = vmax.f32 %v398, 0.0
        %v557 = vmax.f32 %v403, 0.0
        %v558 = vmax.f32 %v408, 0.0
        %v559 = vmax.f32 %v413, 0.0
        %v560 = vmax.f32 %v418, 0.0
        %v561 = vmax.f32 %v423, 0.0
        %v562 = vmax.f32 %v428, 0.0
        %v563 = vmax.f32 %v433, 0.0
        %v564 = vmax.f32 %v438, 0.0
        %v565 = vmax.f32 %v443, 0.0
        %v566 = vmax.f32 %v448, 0.0
        %v567 = vmax.f32 %v453, 0.0
        %v568 = vmax.f32 %v458, 0.0
        %v569 = vmax.f32 %v463, 0.0
        %v570 = vmax.f32 %v468, 0.0
        %v571 = vmax.f32 %v473, 0.0
        %v572 = vmax.f32 %v478, 0.0
        %v573 = vmax.f32 %v483, 0.0
        %v574 = vmax.f32 %v488, 0.0
        %v575 = vmax.f32 %v493, 0.0
        %v576 = vmax.f32 %v498, 0.0
        %v577 = vmax.f32 %v503, 0.0
        %v578 = vmax.f32 %v508, 0.0
        %v579 = vmax.f32 %v513, 0.0
        %v580 = vmax.f32 %v518, 0.0
        %v581 = vmax.f32 %v523, 0.0
        %v582 = vmax.f32 %v528, 0.0
        %v583 = vmax.f32 %v533, 0.0
        %v584 = vmax.f32 %v538, 0.0
        %v585 = vmax.f32 %v543, 0.0
        %v586 = vmax.f32 %v548, 0.0
        %v587 = vmax.f32 %v553, 0.0
        %v588 = vadd.f32 %v556, %v557
        %v589 = vadd.f32 %v588, %v558
        %v590 = vadd.f32 %v589, %v559
        %v591 = vadd.f32 %v590, %v560
        %v592 = vadd.f32 %v591, %v561
        %v593 = vadd.f32 %v592, %v562
        %v594 = vadd.f32 %v593, %v563
        %v595 = vadd.f32 %v594, %v564
        %v596 = vadd.f32 %v595, %v565
        %v597 = vadd.f32 %v596, %v566
        %v598 = vadd.f32 %v597, %v567
        %v599 = vadd.f32 %v598, %v568
        %v600 = vadd.f32 %v599, %v569
        %v601 = vadd.f32 %v600, %v570
        %v602 = vadd.f32 %v601, %v571
        %v603 = vadd.f32 %v602, %v572
        %v604 = vadd.f32 %v603, %v573
        %v605 = vadd.f32 %v604, %v574
        %v606 = vadd.f32 %v605, %v575
        %v607 = vadd.f32 %v606, %v576
        %v608 = vadd.f32 %v607, %v577
        %v609 = vadd.f32 %v608, %v578
        %v610 = vadd.f32 %v609, %v579
        %v611 = vadd.f32 %v610, %v580
        %v612 = vadd.f32 %v611, %v581
        %v613 = vadd.f32 %v612, %v582
        %v614 = vadd.f32 %v613, %v583
        %v615 = vadd.f32 %v614, %v584
        %v616 = vadd.f32 %v615, %v585
        %v617 = vadd.f32 %v616, %v586
        %v618 = vadd.f32 %v617, %v587
        %v619 = vrot.slane %v618, 4
        %v620 = vadd.f32 %v618, %v619
        %v621 = vrot.slane %v620, 2
        %v622 = vadd.f32 %v620, %v621
        %v623 = vrot.slane %v622, 1
        %v624 = vadd.f32 %v622, %v623
        %v625 = vrcp.pop 256.0
        %v626 = vmul.f32 %v624, %v625
        %v627 = vld [vmem:[%s3] sm:$0xff]
        %v628 = vld [vmem:[%s3 + $0x8] sm:$0xff]
        %v629 = vld [vmem:[%s3 + $0x10] sm:$0xff]
        %v630 = vld [vmem:[%s3 + $0x18] sm:$0xff]
        %v631 = vld [vmem:[%s3 + $0x20] sm:$0xff]
        %v632 = vld [vmem:[%s3 + $0x28] sm:$0xff]
        %v633 = vld [vmem:[%s3 + $0x30] sm:$0xff]
        %v634 = vld [vmem:[%s3 + $0x38] sm:$0xff]
        %v635 = vld [vmem:[%s3 + $0x40] sm:$0xff]
        %v636 = vld [vmem:[%s3 + $0x48] sm:$0xff]
        %v637 = vld [vmem:[%s3 + $0x50] sm:$0xff]
        %v638 = vld [vmem:[%s3 + $0x58] sm:$0xff]
        %v639 = vld [vmem:[%s3 + $0x60] sm:$0xff]
        %v640 = vld [vmem:[%s3 + $0x68] sm:$0xff]
        %v641 = vld [vmem:[%s3 + $0x70] sm:$0xff]
        %v642 = vld [vmem:[%s3 + $0x78] sm:$0xff]
        %v643 = vld [vmem:[%s4] sm:$0x1]
        %644 = vmatprep.subr.mxu0 0.0
        %645 = vmatpush1.msra.mxu0 %v627
        %646 = vmatprep.subr.mxu0 0.0
        %647 = vmatpush1.msra.mxu0 %v628
        %648 = vmatprep.subr.mxu0 0.0
        %649 = vmatpush1.msra.mxu0 %v629
        %650 = vmatprep.subr.mxu0 0.0
        %651 = vmatpush1.msra.mxu0 %v630
        %652 = vmatprep.subr.mxu0 0.0
        %653 = vmatpush1.msra.mxu0 %v631
        %654 = vmatprep.subr.mxu0 0.0
        %655 = vmatpush1.msra.mxu0 %v632
        %656 = vmatprep.subr.mxu0 0.0
        %657 = vmatpush1.msra.mxu0 %v633
        %658 = vmatprep.subr.mxu0 0.0
        %659 = vmatpush1.msra.mxu0 %v634
        %660 = vmatprep.subr.mxu0 0.0
        %661 = vmatpush1.msra.mxu0 %v635
        %662 = vmatprep.subr.mxu0 0.0
        %663 = vmatpush1.msra.mxu0 %v636
        %664 = vmatprep.subr.mxu0 0.0
        %665 = vmatpush1.msra.mxu0 %v637
        %666 = vmatprep.subr.mxu0 0.0
        %667 = vmatpush1.msra.mxu0 %v638
        %668 = vmatprep.subr.mxu0 0.0
        %669 = vmatpush1.msra.mxu0 %v639
        %670 = vmatprep.subr.mxu0 0.0
        %671 = vmatpush1.msra.mxu0 %v640
        %672 = vmatprep.subr.mxu0 0.0
        %673 = vmatpush1.msra.mxu0 %v641
        %674 = vmatprep.subr.mxu0 0.0
        %675 = vmatpush1.msra.mxu0 %v642
        %676 = vmatprep.subr.mxu0 0.0
        %677 = vmatpush1.msra.mxu0 0.0
        %678 = vmatprep.subr.mxu0 0.0
        %679 = vmatpush1.msra.mxu0 0.0
        %680 = vmatprep.subr.mxu0 0.0
        %681 = vmatpush1.msra.mxu0 0.0
        %682 = vmatprep.subr.mxu0 0.0
        %683 = vmatpush1.msra.mxu0 0.0
        %684 = vmatprep.subr.mxu0 0.0
        %685 = vmatpush1.msra.mxu0 0.0
        %686 = vmatprep.subr.mxu0 0.0
        %687 = vmatpush1.msra.mxu0 0.0
        %688 = vmatprep.subr.mxu0 0.0
        %689 = vmatpush1.msra.mxu0 0.0
        %690 = vmatprep.subr.mxu0 0.0
        %691 = vmatpush1.msra.mxu0 0.0
        %692 = vmatprep.subr.mxu0 0.0
        %693 = vmatpush1.msra.mxu0 0.0
        %694 = vmatprep.subr.mxu0 0.0
        %695 = vmatpush1.msra.mxu0 0.0
        %696 = vmatprep.subr.mxu0 0.0
        %697 = vmatpush1.msra.mxu0 0.0
        %698 = vmatprep.subr.mxu0 0.0
        %699 = vmatpush1.msra.mxu0 0.0
        %700 = vmatprep.subr.mxu0 0.0
        %701 = vmatpush1.msra.mxu0 0.0
        %702 = vmatprep.subr.mxu0 0.0
        %703 = vmatpush1.msra.mxu0 0.0
        %704 = vmatprep.subr.mxu0 0.0
        %705 = vmatpush1.msra.mxu0 0.0
        %706 = vmatprep.subr.mxu0 0.0
        %707 = vmatpush1.msra.mxu0 0.0
        %708 = vmatprep.mubr.f32.mxu0 0.0
        %709 = vmatmul.mubr.f32.gmra.mrb[0].mxu0 %v626
        %v710 = vpop.f32.mrb[0].mxu0
        %v711 = vadd.f32 %v643, %v710
        %v712 = vpop.f32.mrb[0].mxu0
        %713 = vdwg.mxu0
        %v714 = vmax.f32 %v711, 0.0
        %v715 = vld [vmem:[%s5] sm:$0xff]
        %v716 = vld [vmem:[%s5 + $0x8] sm:$0xff]
        %v717 = vld [vmem:[%s5 + $0x10] sm:$0xff]
        %v718 = vld [vmem:[%s5 + $0x18] sm:$0xff]
        %v719 = vld [vmem:[%s5 + $0x20] sm:$0xff]
        %v720 = vld [vmem:[%s5 + $0x28] sm:$0xff]
        %v721 = vld [vmem:[%s5 + $0x30] sm:$0xff]
        %v722 = vld [vmem:[%s5 + $0x38] sm:$0xff]
        %v723 = vld [vmem:[%s5 + $0x40] sm:$0xff]
        %v724 = vld [vmem:[%s5 + $0x48] sm:$0xff]
        %v725 = vld [vmem:[%s5 + $0x50] sm:$0xff]
        %v726 = vld [vmem:[%s5 + $0x58] sm:$0xff]
        %v727 = vld [vmem:[%s5 + $0x60] sm:$0xff]
        %v728 = vld [vmem:[%s5 + $0x68] sm:$0xff]
        %v729 = vld [vmem:[%s5 + $0x70] sm:$0xff]
        %v730 = vld [vmem:[%s5 + $0x78] sm:$0xff]
        %v731 = vld [vmem:[%s6] sm:$0x1]
        %732 = vmatprep.subr.mxu0 0.0
        %733 = vmatpush1.msra.mxu0 %v715
        %734 = vmatprep.subr.mxu0 0.0
        %735 = vmatpush1.msra.mxu0 %v716
        %736 = vmatprep.subr.mxu0 0.0
        %737 = vmatpush1.msra.mxu0 %v717
        %738 = vmatprep.subr.mxu0 0.0
        %739 = vmatpush1.msra.mxu0 %v718
        %740 = vmatprep.subr.mxu0 0.0
        %741 = vmatpush1.msra.mxu0 %v719
        %742 = vmatprep.subr.mxu0 0.0
        %743 = vmatpush1.msra.mxu0 %v720
        %744 = vmatprep.subr.mxu0 0.0
        %745 = vmatpush1.msra.mxu0 %v721
        %746 = vmatprep.subr.mxu0 0.0
        %747 = vmatpush1.msra.mxu0 %v722
        %748 = vmatprep.subr.mxu0 0.0
        %749 = vmatpush1.msra.mxu0 %v723
        %750 = vmatprep.subr.mxu0 0.0
        %751 = vmatpush1.msra.mxu0 %v724
        %752 = vmatprep.subr.mxu0 0.0
        %753 = vmatpush1.msra.mxu0 %v725
        %754 = vmatprep.subr.mxu0 0.0
        %755 = vmatpush1.msra.mxu0 %v726
        %756 = vmatprep.subr.mxu0 0.0
        %757 = vmatpush1.msra.mxu0 %v727
        %758 = vmatprep.subr.mxu0 0.0
        %759 = vmatpush1.msra.mxu0 %v728
        %760 = vmatprep.subr.mxu0 0.0
        %761 = vmatpush1.msra.mxu0 %v729
        %762 = vmatprep.subr.mxu0 0.0
        %763 = vmatpush1.msra.mxu0 %v730
        %764 = vmatprep.subr.mxu0 0.0
        %765 = vmatpush1.msra.mxu0 0.0
        %766 = vmatprep.subr.mxu0 0.0
        %767 = vmatpush1.msra.mxu0 0.0
        %768 = vmatprep.subr.mxu0 0.0
        %769 = vmatpush1.msra.mxu0 0.0
        %770 = vmatprep.subr.mxu0 0.0
        %771 = vmatpush1.msra.mxu0 0.0
        %772 = vmatprep.subr.mxu0 0.0
        %773 = vmatpush1.msra.mxu0 0.0
        %774 = vmatprep.subr.mxu0 0.0
        %775 = vmatpush1.msra.mxu0 0.0
        %776 = vmatprep.subr.mxu0 0.0
        %777 = vmatpush1.msra.mxu0 0.0
        %778 = vmatprep.subr.mxu0 0.0
        %779 = vmatpush1.msra.mxu0 0.0
        %780 = vmatprep.subr.mxu0 0.0
        %781 = vmatpush1.msra.mxu0 0.0
        %782 = vmatprep.subr.mxu0 0.0
        %783 = vmatpush1.msra.mxu0 0.0
        %784 = vmatprep.subr.mxu0 0.0
        %785 = vmatpush1.msra.mxu0 0.0
        %786 = vmatprep.subr.mxu0 0.0
        %787 = vmatpush1.msra.mxu0 0.0
        %788 = vmatprep.subr.mxu0 0.0
        %789 = vmatpush1.msra.mxu0 0.0
        %790 = vmatprep.subr.mxu0 0.0
        %791 = vmatpush1.msra.mxu0 0.0
        %792 = vmatprep.subr.mxu0 0.0
        %793 = vmatpush1.msra.mxu0 0.0
        %794 = vmatprep.subr.mxu0 0.0
        %795 = vmatpush1.msra.mxu0 0.0
        %796 = vmatprep.mubr.f32.mxu0 0.0
        %797 = vmatmul.mubr.f32.gmra.mrb[0].mxu0 %v714
        %v798 = vpop.f32.mrb[0].mxu0
        %v799 = vadd.f32 %v731, %v798
        %v800 = vpop.f32.mrb[0].mxu0
        %801 = vdwg.mxu0
        %802 = vst [vmem:[%s270] sm:$0x1] %v799
        %s803 = sand.u32 %s181, 1
        %s804 = scalar_lea.sflag [#allocation3], %s803
        %s805 = sand.u32 %s181, 1
        %s806 = scalar_lea.vmem [#allocation2], %s805
        // Predicated region
        $region49: #{convirt_forward.2} parent=47 // pred_check
          %p807 = pneg %p191
        $region50: #{convirt_forward.2} parent=47 // pred_check_branch
          %809 = sbr.rel (%p807) target = $region52
        $region51: #{convirt_forward.2} parent=47 // pred_region
          %s811 = ssub.s32 16, 16
          %812 = vsyncadd %s804, %s811
          %s813 = smul.addr %s21, 16
          %s814 = scalar_lea.hbm %s7, %s813
          %s816 = sshll.u32 %s806, 4
          %s817 = int_to_ptr.vmem [resolvable:$true] %s816
          %819 = dma.vmem_to_hbm [thread:$0]  %s817, 16, %s814, %s804
        $region52: #{convirt_forward.2} parent=47 // pred_fallthru
          _
      $region48: #{convirt_forward.2} parent=5 // pred_fallthru
        _
      %p820 = scmp.le.s32.totalorder 2, %s16
      // Predicated region
      $region53: #{convirt_forward.2} parent=5 // pred_check
        %p821 = pneg %p820
      $region54: #{convirt_forward.2} parent=5 // pred_check_branch
        %823 = sbr.rel (%p821) target = $region56
      $region55: #{convirt_forward.2} parent=5 // pred_region
        %s824 = ssub.s32 %s16, 2
        // Predicated region
        $region57: #{convirt_forward.2} parent=55 // pred_check
          %p825 = pneg %p197
        $region58: #{convirt_forward.2} parent=55 // pred_check_branch
          %827 = sbr.rel (%p825) target = $region60
        $region59: #{convirt_forward.2} parent=55 // pred_region
          %s828 = sand.u32 %s182, 1
          %s829 = scalar_lea.sflag [#allocation3], %s828
          %s830 = sand.u32 %s182, 1
          %s831 = scalar_lea.vmem [#allocation2], %s830
          %832 = dma.done %s829, 16
        $region60: #{convirt_forward.2} parent=55 // pred_fallthru
          _
      $region56: #{convirt_forward.2} parent=5 // pred_fallthru
        _
    $region6: #{convirt_forward.2} parent=1 // loop_footer
      %s20 = sadd.s32 1, %s16
    $region7: #{convirt_forward.2} parent=1 // loop_footer_branch
      %15 = sbr.rel target = $region3
    $region8: #{convirt_forward.2} parent=1 // loop_exit
      _
    %833 = vsyncpa [#allocation3], 1
    %s834 = scalar_lea.sflag [#allocation3], 1
    %835 = vsyncpa %s834, 1

// kernel: convirt_forward.3
$region0: #{convirt_forward.3}
  #allocation0 [shape = 'u32[]', space=smem, size = 0x4, offset = 0x4, fixed_abs, tag = 'smem constant byte address 0x4 - core index']
  #allocation1 [shape = 'u32[144,128]{1,0:T(1,128)}', space=vmem, size = 0x12000, scoped, tag = 'internal scratch']
  %s0 = inlined_call_operand.vmem [shape: f32[8,8,128], index: 0, kind: input, shape index: {}]
  %s1 = inlined_call_operand.vmem [shape: f32[8,8], index: 1, kind: input, shape index: {}]
  %s2 = inlined_call_operand.vmem [shape: f32[128,128], index: 2, kind: input, shape index: {}]
  %s3 = inlined_call_operand.vmem [shape: f32[1,128], index: 3, kind: input, shape index: {}]
  %s4 = inlined_call_operand.vmem [shape: f32[128,128], index: 4, kind: input, shape index: {}]
  %s5 = inlined_call_operand.vmem [shape: f32[1,128], index: 5, kind: input, shape index: {}]
  %s6 = inlined_call_operand.vmem [shape: f32[128,128], index: 6, kind: input, shape index: {}]
  %s7 = inlined_call_operand.vmem [shape: f32[1,128], index: 7, kind: input, shape index: {}]
  %s8 = inlined_call_operand.vmem [shape: f32[8,128], index: 8, kind: output, shape index: {}]
  %s9 = sld [smem:[#allocation0]]
  $region42: #{convirt_forward.3} parent=0
    _
  %s11 = ssub.s32 1, %s9
  %s12 = scalar_select 0, %s11, %s9
  // Predicated region
  $region2: #{convirt_forward.3} parent=0 // pred_check
    _
  $region3: #{convirt_forward.3} parent=0 // pred_check_branch
    %14 = sbr.rel (0) target = $region5
  $region4: #{convirt_forward.3} parent=0 // pred_region
    _
  $region5: #{convirt_forward.3} parent=0 // pred_fallthru
    _
  // Predicated region
  $region6: #{convirt_forward.3} parent=0 // pred_check
    _
  $region7: #{convirt_forward.3} parent=0 // pred_check_branch
    %16 = sbr.rel (0) target = $region9
  $region8: #{convirt_forward.3} parent=0 // pred_region
    _
  $region9: #{convirt_forward.3} parent=0 // pred_fallthru
    _
  // Predicated region
  $region10: #{convirt_forward.3} parent=0 // pred_check
    _
  $region11: #{convirt_forward.3} parent=0 // pred_check_branch
    %18 = sbr.rel (0) target = $region13
  $region12: #{convirt_forward.3} parent=0 // pred_region
    _
  $region13: #{convirt_forward.3} parent=0 // pred_fallthru
    _
  // Predicated region
  $region14: #{convirt_forward.3} parent=0 // pred_check
    _
  $region15: #{convirt_forward.3} parent=0 // pred_check_branch
    %20 = sbr.rel (0) target = $region17
  $region16: #{convirt_forward.3} parent=0 // pred_region
    _
  $region17: #{convirt_forward.3} parent=0 // pred_fallthru
    _
  // Predicated region
  $region18: #{convirt_forward.3} parent=0 // pred_check
    _
  $region19: #{convirt_forward.3} parent=0 // pred_check_branch
    %22 = sbr.rel (0) target = $region21
  $region20: #{convirt_forward.3} parent=0 // pred_region
    _
  $region21: #{convirt_forward.3} parent=0 // pred_fallthru
    _
  // Predicated region
  $region22: #{convirt_forward.3} parent=0 // pred_check
    _
  $region23: #{convirt_forward.3} parent=0 // pred_check_branch
    %24 = sbr.rel (0) target = $region25
  $region24: #{convirt_forward.3} parent=0 // pred_region
    _
  $region25: #{convirt_forward.3} parent=0 // pred_fallthru
    _
  // Predicated region
  $region26: #{convirt_forward.3} parent=0 // pred_check
    _
  $region27: #{convirt_forward.3} parent=0 // pred_check_branch
    %26 = sbr.rel (0) target = $region29
  $region28: #{convirt_forward.3} parent=0 // pred_region
    _
  $region29: #{convirt_forward.3} parent=0 // pred_fallthru
    _
  // Predicated region
  $region30: #{convirt_forward.3} parent=0 // pred_check
    _
  $region31: #{convirt_forward.3} parent=0 // pred_check_branch
    %28 = sbr.rel (0) target = $region33
  $region32: #{convirt_forward.3} parent=0 // pred_region
    _
  $region33: #{convirt_forward.3} parent=0 // pred_fallthru
    _
  %v29 = vld [vmem:[%s0] sm:$0xff]
  %v30 = vld [vmem:[%s0 + $0x8] sm:$0xff]
  %v31 = vld [vmem:[%s0 + $0x10] sm:$0xff]
  %v32 = vld [vmem:[%s0 + $0x18] sm:$0xff]
  %v33 = vld [vmem:[%s0 + $0x20] sm:$0xff]
  %v34 = vld [vmem:[%s0 + $0x28] sm:$0xff]
  %v35 = vld [vmem:[%s0 + $0x30] sm:$0xff]
  %v36 = vld [vmem:[%s0 + $0x38] sm:$0xff]
  %v37 = vld [vmem:[%s1] sm:$0xff]
  %v38 = vlaneseq
  %v39 = vshrl.u32 %v38, 7
  %v40 = vsub.s32 0, %v39
  %v41 = vrot.slane %v37, %v40
  %43 = vbcast.lane.b32.xlu0 %v41, 256
  %v44 = vpop.permute.xlu0 %43
  %v45 = vlaneseq
  %v46 = vshrl.u32 %v45, 7
  %v47 = vsub.s32 1, %v46
  %v48 = vrot.slane %v37, %v47
  %50 = vbcast.lane.b32.xlu0 %v48, 256
  %v51 = vpop.permute.xlu0 %50
  %v52 = vlaneseq
  %v53 = vshrl.u32 %v52, 7
  %v54 = vsub.s32 2, %v53
  %v55 = vrot.slane %v37, %v54
  %57 = vbcast.lane.b32.xlu0 %v55, 256
  %v58 = vpop.permute.xlu0 %57
  %v59 = vlaneseq
  %v60 = vshrl.u32 %v59, 7
  %v61 = vsub.s32 3, %v60
  %v62 = vrot.slane %v37, %v61
  %64 = vbcast.lane.b32.xlu0 %v62, 256
  %v65 = vpop.permute.xlu0 %64
  %v66 = vlaneseq
  %v67 = vshrl.u32 %v66, 7
  %v68 = vsub.s32 4, %v67
  %v69 = vrot.slane %v37, %v68
  %71 = vbcast.lane.b32.xlu0 %v69, 256
  %v72 = vpop.permute.xlu0 %71
  %v73 = vlaneseq
  %v74 = vshrl.u32 %v73, 7
  %v75 = vsub.s32 5, %v74
  %v76 = vrot.slane %v37, %v75
  %78 = vbcast.lane.b32.xlu0 %v76, 256
  %v79 = vpop.permute.xlu0 %78
  %v80 = vlaneseq
  %v81 = vshrl.u32 %v80, 7
  %v82 = vsub.s32 6, %v81
  %v83 = vrot.slane %v37, %v82
  %85 = vbcast.lane.b32.xlu0 %v83, 256
  %v86 = vpop.permute.xlu0 %85
  %v87 = vlaneseq
  %v88 = vshrl.u32 %v87, 7
  %v89 = vsub.s32 7, %v88
  %v90 = vrot.slane %v37, %v89
  %92 = vbcast.lane.b32.xlu0 %v90, 256
  %v93 = vpop.permute.xlu0 %92
  %v94 = vmul.f32 %v29, %v44
  %v95 = vmul.f32 %v30, %v51
  %v96 = vmul.f32 %v31, %v58
  %v97 = vmul.f32 %v32, %v65
  %v98 = vmul.f32 %v33, %v72
  %v99 = vmul.f32 %v34, %v79
  %v100 = vmul.f32 %v35, %v86
  %v101 = vmul.f32 %v36, %v93
  %v102 = vrot.slane %v94, 4
  %v103 = vadd.f32 %v94, %v102
  %v104 = vrot.slane %v103, 2
  %v105 = vadd.f32 %v103, %v104
  %v106 = vrot.slane %v105, 1
  %v107 = vadd.f32 %v105, %v106
  %v108 = vrot.slane %v95, 4
  %v109 = vadd.f32 %v95, %v108
  %v110 = vrot.slane %v109, 2
  %v111 = vadd.f32 %v109, %v110
  %v112 = vrot.slane %v111, 1
  %v113 = vadd.f32 %v111, %v112
  %v114 = vrot.slane %v96, 4
  %v115 = vadd.f32 %v96, %v114
  %v116 = vrot.slane %v115, 2
  %v117 = vadd.f32 %v115, %v116
  %v118 = vrot.slane %v117, 1
  %v119 = vadd.f32 %v117, %v118
  %v120 = vrot.slane %v97, 4
  %v121 = vadd.f32 %v97, %v120
  %v122 = vrot.slane %v121, 2
  %v123 = vadd.f32 %v121, %v122
  %v124 = vrot.slane %v123, 1
  %v125 = vadd.f32 %v123, %v124
  %v126 = vrot.slane %v98, 4
  %v127 = vadd.f32 %v98, %v126
  %v128 = vrot.slane %v127, 2
  %v129 = vadd.f32 %v127, %v128
  %v130 = vrot.slane %v129, 1
  %v131 = vadd.f32 %v129, %v130
  %v132 = vrot.slane %v99, 4
  %v133 = vadd.f32 %v99, %v132
  %v134 = vrot.slane %v133, 2
  %v135 = vadd.f32 %v133, %v134
  %v136 = vrot.slane %v135, 1
  %v137 = vadd.f32 %v135, %v136
  %v138 = vrot.slane %v100, 4
  %v139 = vadd.f32 %v100, %v138
  %v140 = vrot.slane %v139, 2
  %v141 = vadd.f32 %v139, %v140
  %v142 = vrot.slane %v141, 1
  %v143 = vadd.f32 %v141, %v142
  %v144 = vrot.slane %v101, 4
  %v145 = vadd.f32 %v101, %v144
  %v146 = vrot.slane %v145, 2
  %v147 = vadd.f32 %v145, %v146
  %v148 = vrot.slane %v147, 1
  %v149 = vadd.f32 %v147, %v148
  %vm150 = vcmask 64512
  %v151 = vsel %vm150, %v37, 0.0
  %152 = vadd.xlane.f32.xlu0 %v151
  %v153 = vpop.xlane.xlu0 %152
  %v154 = vmax.f32 %v153, 1.0
  %v156 = vrot.slane %v154, 1
  %v157 = vrot.slane %v154, 2
  %v158 = vrot.slane %v154, 3
  %v159 = vrot.slane %v154, 4
  %v160 = vrot.slane %v154, 5
  %v161 = vrot.slane %v154, 6
  %v162 = vrot.slane %v154, 7
  %v171 = vrcp.pop %v154
  %v172 = vmul.f32 %v107, %v171
  %v173 = vrcp.pop %v156
  %v174 = vmul.f32 %v113, %v173
  %v175 = vrcp.pop %v157
  %v176 = vmul.f32 %v119, %v175
  %v177 = vrcp.pop %v158
  %v178 = vmul.f32 %v125, %v177
  %v179 = vrcp.pop %v159
  %v180 = vmul.f32 %v131, %v179
  %v181 = vrcp.pop %v160
  %v182 = vmul.f32 %v137, %v181
  %v183 = vrcp.pop %v161
  %v184 = vmul.f32 %v143, %v183
  %v185 = vrcp.pop %v162
  %v186 = vmul.f32 %v149, %v185
  %v187 = vld [vmem:[%s2] sm:$0xff]
  %v188 = vld [vmem:[%s2 + $0x8] sm:$0xff]
  %v189 = vld [vmem:[%s2 + $0x10] sm:$0xff]
  %v190 = vld [vmem:[%s2 + $0x18] sm:$0xff]
  %v191 = vld [vmem:[%s2 + $0x20] sm:$0xff]
  %v192 = vld [vmem:[%s2 + $0x28] sm:$0xff]
  %v193 = vld [vmem:[%s2 + $0x30] sm:$0xff]
  %v194 = vld [vmem:[%s2 + $0x38] sm:$0xff]
  %v195 = vld [vmem:[%s2 + $0x40] sm:$0xff]
  %v196 = vld [vmem:[%s2 + $0x48] sm:$0xff]
  %v197 = vld [vmem:[%s2 + $0x50] sm:$0xff]
  %v198 = vld [vmem:[%s2 + $0x58] sm:$0xff]
  %v199 = vld [vmem:[%s2 + $0x60] sm:$0xff]
  %v200 = vld [vmem:[%s2 + $0x68] sm:$0xff]
  %v201 = vld [vmem:[%s2 + $0x70] sm:$0xff]
  %v202 = vld [vmem:[%s2 + $0x78] sm:$0xff]
  %v203 = vld [vmem:[%s3] sm:$0x1]
  %v205 = vlaneseq
  %v206 = vshrl.u32 %v205, 7
  %v207 = vsub.s32 0, %v206
  %v208 = vrot.slane %v203, %v207
  %v218 = vrot.slane %v174, 7
  %vm219 = vcmask 1041409
  %v220 = vsel %vm219, %v218, %v172
  %v221 = vrot.slane %v176, 6
  %vm222 = vcmask 1042434
  %v223 = vsel %vm222, %v221, %v220
  %v224 = vrot.slane %v178, 5
  %vm225 = vcmask 1043459
  %v226 = vsel %vm225, %v224, %v223
  %v227 = vrot.slane %v180, 4
  %vm228 = vcmask 1044484
  %v229 = vsel %vm228, %v227, %v226
  %v230 = vrot.slane %v182, 3
  %vm231 = vcmask 1045509
  %v232 = vsel %vm231, %v230, %v229
  %v233 = vrot.slane %v184, 2
  %vm234 = vcmask 1046534
  %v235 = vsel %vm234, %v233, %v232
  %v236 = vrot.slane %v186, 1
  %vm237 = vcmask 1047559
  %v238 = vsel %vm237, %v236, %v235
  %240 = vmatprep.subr.mxu0 0.0
  %241 = vmatpush1.msra.mxu0 %v187
  %242 = vmatprep.subr.mxu0 0.0
  %243 = vmatpush1.msra.mxu0 %v188
  %244 = vmatprep.subr.mxu0 0.0
  %245 = vmatpush1.msra.mxu0 %v189
  %246 = vmatprep.subr.mxu0 0.0
  %247 = vmatpush1.msra.mxu0 %v190
  %248 = vmatprep.subr.mxu0 0.0
  %249 = vmatpush1.msra.mxu0 %v191
  %250 = vmatprep.subr.mxu0 0.0
  %251 = vmatpush1.msra.mxu0 %v192
  %252 = vmatprep.subr.mxu0 0.0
  %253 = vmatpush1.msra.mxu0 %v193
  %254 = vmatprep.subr.mxu0 0.0
  %255 = vmatpush1.msra.mxu0 %v194
  %256 = vmatprep.subr.mxu0 0.0
  %257 = vmatpush1.msra.mxu0 %v195
  %258 = vmatprep.subr.mxu0 0.0
  %259 = vmatpush1.msra.mxu0 %v196
  %260 = vmatprep.subr.mxu0 0.0
  %261 = vmatpush1.msra.mxu0 %v197
  %262 = vmatprep.subr.mxu0 0.0
  %263 = vmatpush1.msra.mxu0 %v198
  %264 = vmatprep.subr.mxu0 0.0
  %265 = vmatpush1.msra.mxu0 %v199
  %266 = vmatprep.subr.mxu0 0.0
  %267 = vmatpush1.msra.mxu0 %v200
  %268 = vmatprep.subr.mxu0 0.0
  %269 = vmatpush1.msra.mxu0 %v201
  %270 = vmatprep.subr.mxu0 0.0
  %271 = vmatpush1.msra.mxu0 %v202
  %272 = vmatprep.subr.mxu0 0.0
  %273 = vmatpush1.msra.mxu0 0.0
  %274 = vmatprep.subr.mxu0 0.0
  %275 = vmatpush1.msra.mxu0 0.0
  %276 = vmatprep.subr.mxu0 0.0
  %277 = vmatpush1.msra.mxu0 0.0
  %278 = vmatprep.subr.mxu0 0.0
  %279 = vmatpush1.msra.mxu0 0.0
  %280 = vmatprep.subr.mxu0 0.0
  %281 = vmatpush1.msra.mxu0 0.0
  %282 = vmatprep.subr.mxu0 0.0
  %283 = vmatpush1.msra.mxu0 0.0
  %284 = vmatprep.subr.mxu0 0.0
  %285 = vmatpush1.msra.mxu0 0.0
  %286 = vmatprep.subr.mxu0 0.0
  %287 = vmatpush1.msra.mxu0 0.0
  %288 = vmatprep.subr.mxu0 0.0
  %289 = vmatpush1.msra.mxu0 0.0
  %290 = vmatprep.subr.mxu0 0.0
  %291 = vmatpush1.msra.mxu0 0.0
  %292 = vmatprep.subr.mxu0 0.0
  %293 = vmatpush1.msra.mxu0 0.0
  %294 = vmatprep.subr.mxu0 0.0
  %295 = vmatpush1.msra.mxu0 0.0
  %296 = vmatprep.subr.mxu0 0.0
  %297 = vmatpush1.msra.mxu0 0.0
  %298 = vmatprep.subr.mxu0 0.0
  %299 = vmatpush1.msra.mxu0 0.0
  %300 = vmatprep.subr.mxu0 0.0
  %301 = vmatpush1.msra.mxu0 0.0
  %302 = vmatprep.subr.mxu0 0.0
  %303 = vmatpush1.msra.mxu0 0.0
  %304 = vmatprep.mubr.f32.mxu0 0.0
  %305 = vmatmul.mubr.f32.gmra.mrb[0].mxu0 %v238
  %v306 = vpop.f32.mrb[0].mxu0
  %v307 = vadd.f32 %v208, %v306
  %v308 = vpop.f32.mrb[0].mxu0
  %309 = vdwg.mxu0
  %v310 = vtanh.pop %v307
  %v311 = vld [vmem:[%s4] sm:$0xff]
  %v312 = vld [vmem:[%s4 + $0x8] sm:$0xff]
  %v313 = vld [vmem:[%s4 + $0x10] sm:$0xff]
  %v314 = vld [vmem:[%s4 + $0x18] sm:$0xff]
  %v315 = vld [vmem:[%s4 + $0x20] sm:$0xff]
  %v316 = vld [vmem:[%s4 + $0x28] sm:$0xff]
  %v317 = vld [vmem:[%s4 + $0x30] sm:$0xff]
  %v318 = vld [vmem:[%s4 + $0x38] sm:$0xff]
  %v319 = vld [vmem:[%s4 + $0x40] sm:$0xff]
  %v320 = vld [vmem:[%s4 + $0x48] sm:$0xff]
  %v321 = vld [vmem:[%s4 + $0x50] sm:$0xff]
  %v322 = vld [vmem:[%s4 + $0x58] sm:$0xff]
  %v323 = vld [vmem:[%s4 + $0x60] sm:$0xff]
  %v324 = vld [vmem:[%s4 + $0x68] sm:$0xff]
  %v325 = vld [vmem:[%s4 + $0x70] sm:$0xff]
  %v326 = vld [vmem:[%s4 + $0x78] sm:$0xff]
  %v327 = vld [vmem:[%s5] sm:$0x1]
  %v329 = vlaneseq
  %v330 = vshrl.u32 %v329, 7
  %v331 = vsub.s32 0, %v330
  %v332 = vrot.slane %v327, %v331
  %334 = vmatprep.subr.mxu0 0.0
  %335 = vmatpush1.msra.mxu0 %v311
  %336 = vmatprep.subr.mxu0 0.0
  %337 = vmatpush1.msra.mxu0 %v312
  %338 = vmatprep.subr.mxu0 0.0
  %339 = vmatpush1.msra.mxu0 %v313
  %340 = vmatprep.subr.mxu0 0.0
  %341 = vmatpush1.msra.mxu0 %v314
  %342 = vmatprep.subr.mxu0 0.0
  %343 = vmatpush1.msra.mxu0 %v315
  %344 = vmatprep.subr.mxu0 0.0
  %345 = vmatpush1.msra.mxu0 %v316
  %346 = vmatprep.subr.mxu0 0.0
  %347 = vmatpush1.msra.mxu0 %v317
  %348 = vmatprep.subr.mxu0 0.0
  %349 = vmatpush1.msra.mxu0 %v318
  %350 = vmatprep.subr.mxu0 0.0
  %351 = vmatpush1.msra.mxu0 %v319
  %352 = vmatprep.subr.mxu0 0.0
  %353 = vmatpush1.msra.mxu0 %v320
  %354 = vmatprep.subr.mxu0 0.0
  %355 = vmatpush1.msra.mxu0 %v321
  %356 = vmatprep.subr.mxu0 0.0
  %357 = vmatpush1.msra.mxu0 %v322
  %358 = vmatprep.subr.mxu0 0.0
  %359 = vmatpush1.msra.mxu0 %v323
  %360 = vmatprep.subr.mxu0 0.0
  %361 = vmatpush1.msra.mxu0 %v324
  %362 = vmatprep.subr.mxu0 0.0
  %363 = vmatpush1.msra.mxu0 %v325
  %364 = vmatprep.subr.mxu0 0.0
  %365 = vmatpush1.msra.mxu0 %v326
  %366 = vmatprep.subr.mxu0 0.0
  %367 = vmatpush1.msra.mxu0 0.0
  %368 = vmatprep.subr.mxu0 0.0
  %369 = vmatpush1.msra.mxu0 0.0
  %370 = vmatprep.subr.mxu0 0.0
  %371 = vmatpush1.msra.mxu0 0.0
  %372 = vmatprep.subr.mxu0 0.0
  %373 = vmatpush1.msra.mxu0 0.0
  %374 = vmatprep.subr.mxu0 0.0
  %375 = vmatpush1.msra.mxu0 0.0
  %376 = vmatprep.subr.mxu0 0.0
  %377 = vmatpush1.msra.mxu0 0.0
  %378 = vmatprep.subr.mxu0 0.0
  %379 = vmatpush1.msra.mxu0 0.0
  %380 = vmatprep.subr.mxu0 0.0
  %381 = vmatpush1.msra.mxu0 0.0
  %382 = vmatprep.subr.mxu0 0.0
  %383 = vmatpush1.msra.mxu0 0.0
  %384 = vmatprep.subr.mxu0 0.0
  %385 = vmatpush1.msra.mxu0 0.0
  %386 = vmatprep.subr.mxu0 0.0
  %387 = vmatpush1.msra.mxu0 0.0
  %388 = vmatprep.subr.mxu0 0.0
  %389 = vmatpush1.msra.mxu0 0.0
  %390 = vmatprep.subr.mxu0 0.0
  %391 = vmatpush1.msra.mxu0 0.0
  %392 = vmatprep.subr.mxu0 0.0
  %393 = vmatpush1.msra.mxu0 0.0
  %394 = vmatprep.subr.mxu0 0.0
  %395 = vmatpush1.msra.mxu0 0.0
  %396 = vmatprep.subr.mxu0 0.0
  %397 = vmatpush1.msra.mxu0 0.0
  %398 = vmatprep.mubr.f32.mxu0 0.0
  %399 = vmatmul.mubr.f32.gmra.mrb[0].mxu0 %v310
  %v400 = vpop.f32.mrb[0].mxu0
  %v401 = vadd.f32 %v332, %v400
  %v402 = vpop.f32.mrb[0].mxu0
  %403 = vdwg.mxu0
  %v404 = vmax.f32 %v401, 0.0
  %v405 = vld [vmem:[%s6] sm:$0xff]
  %v406 = vld [vmem:[%s6 + $0x8] sm:$0xff]
  %v407 = vld [vmem:[%s6 + $0x10] sm:$0xff]
  %v408 = vld [vmem:[%s6 + $0x18] sm:$0xff]
  %v409 = vld [vmem:[%s6 + $0x20] sm:$0xff]
  %v410 = vld [vmem:[%s6 + $0x28] sm:$0xff]
  %v411 = vld [vmem:[%s6 + $0x30] sm:$0xff]
  %v412 = vld [vmem:[%s6 + $0x38] sm:$0xff]
  %v413 = vld [vmem:[%s6 + $0x40] sm:$0xff]
  %v414 = vld [vmem:[%s6 + $0x48] sm:$0xff]
  %v415 = vld [vmem:[%s6 + $0x50] sm:$0xff]
  %v416 = vld [vmem:[%s6 + $0x58] sm:$0xff]
  %v417 = vld [vmem:[%s6 + $0x60] sm:$0xff]
  %v418 = vld [vmem:[%s6 + $0x68] sm:$0xff]
  %v419 = vld [vmem:[%s6 + $0x70] sm:$0xff]
  %v420 = vld [vmem:[%s6 + $0x78] sm:$0xff]
  %v421 = vld [vmem:[%s7] sm:$0x1]
  %v423 = vlaneseq
  %v424 = vshrl.u32 %v423, 7
  %v425 = vsub.s32 0, %v424
  %v426 = vrot.slane %v421, %v425
  %428 = vmatprep.subr.mxu0 0.0
  %429 = vmatpush1.msra.mxu0 %v405
  %430 = vmatprep.subr.mxu0 0.0
  %431 = vmatpush1.msra.mxu0 %v406
  %432 = vmatprep.subr.mxu0 0.0
  %433 = vmatpush1.msra.mxu0 %v407
  %434 = vmatprep.subr.mxu0 0.0
  %435 = vmatpush1.msra.mxu0 %v408
  %436 = vmatprep.subr.mxu0 0.0
  %437 = vmatpush1.msra.mxu0 %v409
  %438 = vmatprep.subr.mxu0 0.0
  %439 = vmatpush1.msra.mxu0 %v410
  %440 = vmatprep.subr.mxu0 0.0
  %441 = vmatpush1.msra.mxu0 %v411
  %442 = vmatprep.subr.mxu0 0.0
  %443 = vmatpush1.msra.mxu0 %v412
  %444 = vmatprep.subr.mxu0 0.0
  %445 = vmatpush1.msra.mxu0 %v413
  %446 = vmatprep.subr.mxu0 0.0
  %447 = vmatpush1.msra.mxu0 %v414
  %448 = vmatprep.subr.mxu0 0.0
  %449 = vmatpush1.msra.mxu0 %v415
  %450 = vmatprep.subr.mxu0 0.0
  %451 = vmatpush1.msra.mxu0 %v416
  %452 = vmatprep.subr.mxu0 0.0
  %453 = vmatpush1.msra.mxu0 %v417
  %454 = vmatprep.subr.mxu0 0.0
  %455 = vmatpush1.msra.mxu0 %v418
  %456 = vmatprep.subr.mxu0 0.0
  %457 = vmatpush1.msra.mxu0 %v419
  %458 = vmatprep.subr.mxu0 0.0
  %459 = vmatpush1.msra.mxu0 %v420
  %460 = vmatprep.subr.mxu0 0.0
  %461 = vmatpush1.msra.mxu0 0.0
  %462 = vmatprep.subr.mxu0 0.0
  %463 = vmatpush1.msra.mxu0 0.0
  %464 = vmatprep.subr.mxu0 0.0
  %465 = vmatpush1.msra.mxu0 0.0
  %466 = vmatprep.subr.mxu0 0.0
  %467 = vmatpush1.msra.mxu0 0.0
  %468 = vmatprep.subr.mxu0 0.0
  %469 = vmatpush1.msra.mxu0 0.0
  %470 = vmatprep.subr.mxu0 0.0
  %471 = vmatpush1.msra.mxu0 0.0
  %472 = vmatprep.subr.mxu0 0.0
  %473 = vmatpush1.msra.mxu0 0.0
  %474 = vmatprep.subr.mxu0 0.0
  %475 = vmatpush1.msra.mxu0 0.0
  %476 = vmatprep.subr.mxu0 0.0
  %477 = vmatpush1.msra.mxu0 0.0
  %478 = vmatprep.subr.mxu0 0.0
  %479 = vmatpush1.msra.mxu0 0.0
  %480 = vmatprep.subr.mxu0 0.0
  %481 = vmatpush1.msra.mxu0 0.0
  %482 = vmatprep.subr.mxu0 0.0
  %483 = vmatpush1.msra.mxu0 0.0
  %484 = vmatprep.subr.mxu0 0.0
  %485 = vmatpush1.msra.mxu0 0.0
  %486 = vmatprep.subr.mxu0 0.0
  %487 = vmatpush1.msra.mxu0 0.0
  %488 = vmatprep.subr.mxu0 0.0
  %489 = vmatpush1.msra.mxu0 0.0
  %490 = vmatprep.subr.mxu0 0.0
  %491 = vmatpush1.msra.mxu0 0.0
  %492 = vmatprep.mubr.f32.mxu0 0.0
  %493 = vmatmul.mubr.f32.gmra.mrb[0].mxu0 %v404
  %v494 = vpop.f32.mrb[0].mxu0
  %v495 = vadd.f32 %v426, %v494
  %v496 = vpop.f32.mrb[0].mxu0
  %497 = vdwg.mxu0
  %498 = vst [vmem:[%s8] sm:$0xff] %v495
  // Predicated region
  $region34: #{convirt_forward.3} parent=0 // pred_check
    _
  $region35: #{convirt_forward.3} parent=0 // pred_check_branch
    %500 = sbr.rel (0) target = $region37
  $region36: #{convirt_forward.3} parent=0 // pred_region
    _
  $region37: #{convirt_forward.3} parent=0 // pred_fallthru
    _
  // Predicated region
  $region38: #{convirt_forward.3} parent=0 // pred_check
    _
  $region39: #{convirt_forward.3} parent=0 // pred_check_branch
    %502 = sbr.rel (0) target = $region41
  $region40: #{convirt_forward.3} parent=0 // pred_region
    _
  $region41: #{convirt_forward.3} parent=0 // pred_fallthru
    _

</llo_original>
